<compile_context>
chip_gen: v5e
topology: v5e:2x2
jax: 0.10.0
libtpu: 0.0.40
codegen_flags: <defaults>
</compile_context>

<pallas_src>
import functools

import jax
import jax.numpy as jnp
from jax import lax
from jax.experimental import pallas as pl
from jax.experimental.pallas import tpu as pltpu


def _round_up(v, m):
    return ((v + m - 1) // m) * m


def _vmem_budget_bytes():
    """~85% of this generation's physical VMEM (54 MiB conservative fallback)."""
    try:
        cap = int(pltpu.get_tpu_info().vmem_capacity_bytes)
        return int(0.85 * cap)
    except Exception:
        return 54 << 20


def _choose_tile_rows(n, budget, override=None):
    """Row-tile size for the streaming path and the padded node count."""
    if override is not None:
        tm = _round_up(max(int(override), 8), 8)
    else:
        n128 = _round_up(n, 128)
        tm = 512
        # Keep the double-buffered bf16 A row tile within ~1/4 of the budget.
        while tm > 8 and 2 * (tm * n128 * 2) > budget // 4:
            tm //= 2
        tm = min(tm, n128)
    n_p = _round_up(_round_up(n, 128), tm)
    return tm, n_p


# ----------------------------------------------------------------------------
# Resident path: single fused kernel, A_hat held in VMEM across all K steps.
# ----------------------------------------------------------------------------
def _appnp_resident_kernel(x_ref, w1_ref, b1_ref, w2_ref, b2_ref, a_hbm_ref,
                           o_ref, a_vmem, a_sem, *, K, alpha, unroll):
    # Start streaming A_hat (dominant byte count) HBM -> VMEM and hide it
    # behind the MLP matmuls.
    a_copy = pltpu.make_async_copy(a_hbm_ref, a_vmem, a_sem)
    a_copy.start()

    # ---- MLP: relu(x @ W1 + b1) @ W2 + b2 (f32 MXU accumulation) ----
    x = x_ref[...]
    h = jnp.dot(x, w1_ref[...], preferred_element_type=jnp.float32) + b1_ref[...]
    h = jnp.maximum(h, 0.0)
    h = jnp.dot(h, w2_ref[...], preferred_element_type=jnp.float32) + b2_ref[...]
    ah = alpha * h                       # loop-invariant, hoisted out of the loop
    one_minus_alpha = 1.0 - alpha

    a_copy.wait()
    a = a_vmem[...]                      # bf16 [n_p, n_p]

    # ---- APPNP propagation: z_{k+1} = (1 - alpha) * A_hat @ z_k + alpha * h ----
    def body(_, z):
        az = jnp.dot(a, z.astype(a.dtype), preferred_element_type=jnp.float32)
        return one_minus_alpha * az + ah

    z = lax.fori_loop(0, K, body, h, unroll=unroll)
    o_ref[...] = z.astype(o_ref.dtype)


# ----------------------------------------------------------------------------
# Streaming path: MLP kernel + row-tiled propagation kernel (A re-read per K).
# ----------------------------------------------------------------------------
def _mlp_kernel(x_ref, w1_ref, b1_ref, w2_ref, b2_ref, h_ref):
    h = jnp.dot(x_ref[...], w1_ref[...], preferred_element_type=jnp.float32) + b1_ref[...]
    h = jnp.maximum(h, 0.0)
    h_ref[...] = jnp.dot(h, w2_ref[...], preferred_element_type=jnp.float32) + b2_ref[...]


def _prop_stream_kernel(a_ref, h_ref, o_ref, z0_ref, z1_ref, *, alpha):
    k = pl.program_id(0)                 # propagation step (sequential)
    i = pl.program_id(1)                 # node row tile
    tm = a_ref.shape[0]
    row0 = pl.multiple_of(i * tm, tm)

    @pl.when(jnp.logical_and(k == 0, i == 0))
    def _():
        z0_ref[...] = h_ref[...]         # z_0 = h

    a_tile = a_ref[...]                  # (tm, n_p) bf16, double-buffered by Pallas
    h_tile = h_ref[pl.ds(row0, tm), :]   # (tm, out_p) f32, h resident in VMEM
    one_minus_alpha = 1.0 - alpha

    def step(z_src_ref, z_dst_ref):
        az = jnp.dot(a_tile, z_src_ref[...].astype(a_tile.dtype),
                     preferred_element_type=jnp.float32)
        z_new = one_minus_alpha * az + alpha * h_tile
        z_dst_ref[pl.ds(row0, tm), :] = z_new
        # Written every step; the k == K-1 pass overwrites with the final value.
        o_ref[...] = z_new.astype(o_ref.dtype)

    # Ping-pong between the two z buffers with a static-parity split (z_new rows
    # depend on *all* rows of z_old, so in-place update within a step is invalid).
    @pl.when(lax.rem(k, 2) == 0)
    def _():
        step(z0_ref, z1_ref)

    @pl.when(lax.rem(k, 2) == 1)
    def _():
        step(z1_ref, z0_ref)


# ----------------------------------------------------------------------------
# Wrapper
# ----------------------------------------------------------------------------
def appnp_forward(x, a_hat, w1, b1, w2, b2, *, K=10, alpha=0.1,
                  force_stream=False, tile_rows=None):
    """x: [N, F_in], a_hat: [N, N], w1: [F_in, H], b1: [H], w2: [H, C], b2: [C]."""
    n, f_in = x.shape
    hid = w1.shape[1]
    out_c = w2.shape[1]
    K = int(K)
    alpha = float(alpha)

    # Zero-pad lane dims to 128 (exact: padded A rows/cols are zero, so padded
    # node rows never leak into real rows; padded hidden/output columns get
    # zero weights/biases and contribute nothing to the returned slice).
    f_in_p = _round_up(f_in, 128)
    hid_p = _round_up(hid, 128)
    out_p = _round_up(out_c, 128)

    budget = _vmem_budget_bytes()

    w1_p = jnp.zeros((f_in_p, hid_p), jnp.float32).at[:f_in, :hid].set(w1)
    b1_p = jnp.zeros((1, hid_p), jnp.float32).at[0, :hid].set(b1)
    w2_p = jnp.zeros((hid_p, out_p), jnp.float32).at[:hid, :out_c].set(w2)
    b2_p = jnp.zeros((1, out_p), jnp.float32).at[0, :out_c].set(b2)

    # Resident-footprint estimate (A scratch + inputs/output ~double-buffered +
    # generous allowance for h/z/matmul temps, since unrolling duplicates temps).
    n_res = _round_up(n, 128)
    resident_est = (
        n_res * n_res * 2
        + 2 * (n_res * f_in_p + n_res * out_p) * 4
        + (f_in_p * hid_p + hid_p * out_p + hid_p + out_p) * 4
        + 6 * n_res * max(hid_p, out_p) * 4
    )
    use_resident = (not force_stream) and resident_est <= int(0.9 * budget)

    if use_resident:
        # ------------------------- resident (fused) path -------------------------
        n_p = n_res
        a_p = jnp.zeros((n_p, n_p), jnp.bfloat16).at[:n, :n].set(a_hat.astype(jnp.bfloat16))
        x_p = jnp.zeros((n_p, f_in_p), jnp.float32).at[:n, :f_in].set(x.astype(jnp.float32))

        kernel = functools.partial(
            _appnp_resident_kernel, K=K, alpha=alpha,
            unroll=bool(n_p <= 1024))   # full unroll only in the tiny-N regime

        flops = int(2 * n_p * f_in_p * hid_p + 2 * n_p * hid_p * out_p
                    + 2 * K * n_p * n_p * out_p + 3 * K * n_p * out_p)
        bytes_accessed = int(n_p * n_p * 2
                             + (n_p * f_in_p + f_in_p * hid_p + hid_p * out_p
                                + hid_p + out_p) * 4
                             + n_p * out_p * 4)

        def full(arr):
            ndim = arr.ndim
            return pl.BlockSpec(arr.shape, lambda: (0,) * ndim)

        out = pl.pallas_call(
            kernel,
            out_shape=jax.ShapeDtypeStruct((n_p, out_p), jnp.float32),
            in_specs=[full(x_p), full(w1_p), full(b1_p), full(w2_p), full(b2_p),
                      pl.BlockSpec(memory_space=pl.ANY)],   # A stays in HBM; manual DMA
            out_specs=pl.BlockSpec((n_p, out_p), lambda: (0, 0)),
            scratch_shapes=[pltpu.VMEM((n_p, n_p), jnp.bfloat16),
                            pltpu.SemaphoreType.DMA(())],
            compiler_params=pltpu.CompilerParams(vmem_limit_bytes=budget),
            cost_estimate=pl.CostEstimate(flops=flops, transcendentals=0,
                                          bytes_accessed=bytes_accessed),
        )(x_p, w1_p, b1_p, w2_p, b2_p, a_p)
        return out[:n, :out_c]

    # --------------------------- row-tiled streaming path ---------------------------
    tm, n_p = _choose_tile_rows(n, budget, tile_rows)
    n_tiles = n_p // tm
    a_p = jnp.zeros((n_p, n_p), jnp.bfloat16).at[:n, :n].set(a_hat.astype(jnp.bfloat16))
    x_p = jnp.zeros((n_p, f_in_p), jnp.float32).at[:n, :f_in].set(x.astype(jnp.float32))

    # MLP, row-tiled over nodes (weights resident).
    h_p = pl.pallas_call(
        _mlp_kernel,
        out_shape=jax.ShapeDtypeStruct((n_p, out_p), jnp.float32),
        grid=(n_tiles,),
        in_specs=[pl.BlockSpec((tm, f_in_p), lambda i: (i, 0)),
                  pl.BlockSpec((f_in_p, hid_p), lambda i: (0, 0)),
                  pl.BlockSpec((1, hid_p), lambda i: (0, 0)),
                  pl.BlockSpec((hid_p, out_p), lambda i: (0, 0)),
                  pl.BlockSpec((1, out_p), lambda i: (0, 0))],
        out_specs=pl.BlockSpec((tm, out_p), lambda i: (i, 0)),
        compiler_params=pltpu.CompilerParams(dimension_semantics=("parallel",),
                                             vmem_limit_bytes=budget),
        cost_estimate=pl.CostEstimate(
            flops=int(2 * n_p * f_in_p * hid_p + 2 * n_p * hid_p * out_p),
            transcendentals=0,
            bytes_accessed=int((n_p * f_in_p + n_p * out_p
                                + f_in_p * hid_p + hid_p * out_p) * 4)),
    )(x_p, w1_p, b1_p, w2_p, b2_p)

    # Propagation: grid=(K, n_tiles); A row tiles streamed (double-buffered by
    # BlockSpec) and re-read once per K step; h and the z ping-pong stay in VMEM.
    prop_kernel = functools.partial(_prop_stream_kernel, alpha=alpha)
    out = pl.pallas_call(
        prop_kernel,
        out_shape=jax.ShapeDtypeStruct((n_p, out_p), jnp.float32),
        grid=(K, n_tiles),
        in_specs=[pl.BlockSpec((tm, n_p), lambda k, i: (i, 0)),
                  pl.BlockSpec((n_p, out_p), lambda k, i: (0, 0))],
        out_specs=pl.BlockSpec((tm, out_p), lambda k, i: (i, 0)),
        scratch_shapes=[pltpu.VMEM((n_p, out_p), jnp.float32),
                        pltpu.VMEM((n_p, out_p), jnp.float32)],
        compiler_params=pltpu.CompilerParams(
            dimension_semantics=("arbitrary", "arbitrary"),
            vmem_limit_bytes=budget),
        cost_estimate=pl.CostEstimate(
            flops=int(2 * K * n_p * n_p * out_p + 3 * K * n_p * out_p),
            transcendentals=0,
            bytes_accessed=int(K * n_p * n_p * 2 + 2 * n_p * out_p * 4)),
    )(a_p, h_p)
    return out[:n, :out_c]


# ----------------------------------------------------------------------------
# Plain-JAX glue + reference
# ----------------------------------------------------------------------------
def gcn_norm_dense(edge_index, edge_weight, num_nodes):
    """Dense GCN-normalized adjacency with self-loops (plain-JAX glue).

    Note: uses the row-sum degree of (A + I) for both D^{-1/2} factors; PyG's
    gcn_norm uses the in-degree — identical only for symmetric graphs.
    """
    row, col = edge_index[0], edge_index[1]
    if edge_weight is None:
        edge_weight = jnp.ones(row.shape[0], dtype=jnp.float32)
    a = jnp.zeros((num_nodes, num_nodes), dtype=jnp.float32)
    a = a.at[row, col].add(edge_weight)
    a = a + jnp.eye(num_nodes, dtype=jnp.float32)
    deg = a.sum(axis=1)
    dinv = jnp.where(deg > 0, lax.rsqrt(deg), 0.0)
    return dinv[:, None] * a * dinv[None, :]


def _reference(x, a_hat, w1, b1, w2, b2, K, alpha):
    """Plain-JAX reference mirroring the kernel's precision choices."""
    a_bf = a_hat.astype(jnp.bfloat16)
    h = jnp.maximum(x @ w1 + b1, 0.0) @ w2 + b2
    z = h
    for _ in range(K):
        az = jnp.dot(a_bf, z.astype(jnp.bfloat16), preferred_element_type=jnp.float32)
        z = (1.0 - alpha) * az + alpha * h
    return z


if __name__ == "__main__":
    key = jax.random.PRNGKey(0)
    k_x, k_e, k_w1, k_b1, k_w2, k_b2, k_x2, k_e2 = jax.random.split(key, 8)

    # Shapes consistent with APPNP(in_channels=32, out_channels=8, hids=[16]).
    IN_C, HID, OUT_C = 32, 16, 8
    K_STEPS, ALPHA = 10, 0.1

    w1 = jax.random.normal(k_w1, (IN_C, HID), dtype=jnp.float32) * (1.0 / jnp.sqrt(IN_C))
    b1 = jax.random.normal(k_b1, (HID,), dtype=jnp.float32) * 0.01
    w2 = jax.random.normal(k_w2, (HID, OUT_C), dtype=jnp.float32) * (1.0 / jnp.sqrt(HID))
    b2 = jax.random.normal(k_b2, (OUT_C,), dtype=jnp.float32) * 0.01

    # ---- Test 1: small graph -> resident (fused, A-in-VMEM) path ----
    N1, E1 = 64, 256
    x1 = jax.random.normal(k_x, (N1, IN_C), dtype=jnp.float32)
    ei1 = jax.random.randint(k_e, (2, E1), 0, N1, dtype=jnp.int32)
    a1 = gcn_norm_dense(ei1, None, N1)

    out1 = appnp_forward(x1, a1, w1, b1, w2, b2, K=K_STEPS, alpha=ALPHA)
    jax.block_until_ready(out1)
    ref1 = _reference(x1, a1, w1, b1, w2, b2, K_STEPS, ALPHA)
    assert out1.shape == (N1, OUT_C)
    assert jnp.allclose(out1, ref1, atol=1e-2, rtol=1e-2)

    # ---- Test 2: larger graph -> forced row-tiled streaming path ----
    N2, E2 = 256, 2048
    x2 = jax.random.normal(k_x2, (N2, IN_C), dtype=jnp.float32)
    ei2 = jax.random.randint(k_e2, (2, E2), 0, N2, dtype=jnp.int32)
    a2 = gcn_norm_dense(ei2, None, N2)

    out2 = appnp_forward(x2, a2, w1, b1, w2, b2, K=K_STEPS, alpha=ALPHA,
                         force_stream=True, tile_rows=128)
    jax.block_until_ready(out2)
    ref2 = _reference(x2, a2, w1, b1, w2, b2, K_STEPS, ALPHA)
    assert out2.shape == (N2, OUT_C)
    assert jnp.allclose(out2, ref2, atol=1e-2, rtol=1e-2)

    print("KERNEL_OK")
</pallas_src>

<mosaic_0001>
module attributes {stable_mosaic.version = 11 : i64} {
  func.func @_appnp_resident_kernel(%arg0: memref<128x128xf32, #tpu.memory_space<vmem>>, %arg1: memref<128x128xf32, #tpu.memory_space<vmem>>, %arg2: memref<1x128xf32, #tpu.memory_space<vmem>>, %arg3: memref<128x128xf32, #tpu.memory_space<vmem>>, %arg4: memref<1x128xf32, #tpu.memory_space<vmem>>, %arg5: memref<128x128xbf16, #tpu.memory_space<any>>, %arg6: memref<128x128xf32, #tpu.memory_space<vmem>>, %arg7: memref<128x128xbf16, #tpu.memory_space<vmem>>, %arg8: memref<!tpu.dma_semaphore, #tpu.memory_space<semaphore_mem>>) attributes {dimension_semantics = [], scalar_prefetch = 0 : i64, scratch_operands = 2 : i64, tpu.core_type = #tpu.core_type<tc>} {
    tpu.enqueue_dma source(%arg5 : memref<128x128xbf16, #tpu.memory_space<any>>) target(%arg7 : memref<128x128xbf16, #tpu.memory_space<vmem>>) target_semaphore(%arg8 : memref<!tpu.dma_semaphore, #tpu.memory_space<semaphore_mem>>)
    %c0 = arith.constant 0 : index
    %c0_0 = arith.constant 0 : index
    %0 = vector.load %arg0[%c0, %c0_0] : memref<128x128xf32, #tpu.memory_space<vmem>>, vector<128x128xf32>
    %c0_1 = arith.constant 0 : index
    %c0_2 = arith.constant 0 : index
    %1 = vector.load %arg1[%c0_1, %c0_2] : memref<128x128xf32, #tpu.memory_space<vmem>>, vector<128x128xf32>
    %cst = arith.constant dense<0.000000e+00> : vector<128x128xf32>
    %2 = tpu.matmul %0, %1, %cst {dimension_numbers = #tpu.dot_dimension_numbers<[1], [0], [0], [1], [0, 0, 1, 1], [], []>} : vector<128x128xf32>, vector<128x128xf32>, vector<128x128xf32> -> vector<128x128xf32>
    %c0_3 = arith.constant 0 : index
    %c0_4 = arith.constant 0 : index
    %3 = vector.load %arg2[%c0_3, %c0_4] : memref<1x128xf32, #tpu.memory_space<vmem>>, vector<1x128xf32>
    %4 = vector.broadcast %3 : vector<1x128xf32> to vector<128x128xf32>
    %5 = arith.addf %2, %4 : vector<128x128xf32>
    %cst_5 = arith.constant 0.000000e+00 : f32
    %6 = vector.broadcast %cst_5 : f32 to vector<128x128xf32>
    %7 = arith.maximumf %5, %6 : vector<128x128xf32>
    %c0_6 = arith.constant 0 : index
    %c0_7 = arith.constant 0 : index
    %8 = vector.load %arg3[%c0_6, %c0_7] : memref<128x128xf32, #tpu.memory_space<vmem>>, vector<128x128xf32>
    %cst_8 = arith.constant dense<0.000000e+00> : vector<128x128xf32>
    %9 = tpu.matmul %7, %8, %cst_8 {dimension_numbers = #tpu.dot_dimension_numbers<[1], [0], [0], [1], [0, 0, 1, 1], [], []>} : vector<128x128xf32>, vector<128x128xf32>, vector<128x128xf32> -> vector<128x128xf32>
    %c0_9 = arith.constant 0 : index
    %c0_10 = arith.constant 0 : index
    %10 = vector.load %arg4[%c0_9, %c0_10] : memref<1x128xf32, #tpu.memory_space<vmem>>, vector<1x128xf32>
    %11 = vector.broadcast %10 : vector<1x128xf32> to vector<128x128xf32>
    %12 = arith.addf %9, %11 : vector<128x128xf32>
    %cst_11 = arith.constant 1.000000e-01 : f32
    %13 = vector.broadcast %cst_11 : f32 to vector<128x128xf32>
    %14 = arith.mulf %13, %12 : vector<128x128xf32>
    tpu.wait_dma2 semaphore(%arg8 : memref<!tpu.dma_semaphore, #tpu.memory_space<semaphore_mem>>) src(%arg5 : memref<128x128xbf16, #tpu.memory_space<any>>) dst(%arg7 : memref<128x128xbf16, #tpu.memory_space<vmem>>)
    %c0_12 = arith.constant 0 : index
    %c0_13 = arith.constant 0 : index
    %15 = vector.load %arg7[%c0_12, %c0_13] : memref<128x128xbf16, #tpu.memory_space<vmem>>, vector<128x128xbf16>
    %c0_i32 = arith.constant 0 : i32
    %16 = arith.truncf %12 : vector<128x128xf32> to vector<128x128xbf16>
    %cst_14 = arith.constant dense<0.000000e+00> : vector<128x128xf32>
    %17 = tpu.matmul %15, %16, %cst_14 {dimension_numbers = #tpu.dot_dimension_numbers<[1], [0], [0], [1], [0, 0, 1, 1], [], []>} : vector<128x128xbf16>, vector<128x128xbf16>, vector<128x128xf32> -> vector<128x128xf32>
    %cst_15 = arith.constant 0.899999976 : f32
    %18 = vector.broadcast %cst_15 : f32 to vector<128x128xf32>
    %19 = arith.mulf %18, %17 : vector<128x128xf32>
    %20 = arith.addf %19, %14 : vector<128x128xf32>
    %c1_i32 = arith.constant 1 : i32
    %21 = arith.truncf %20 : vector<128x128xf32> to vector<128x128xbf16>
    %cst_16 = arith.constant dense<0.000000e+00> : vector<128x128xf32>
    %22 = tpu.matmul %15, %21, %cst_16 {dimension_numbers = #tpu.dot_dimension_numbers<[1], [0], [0], [1], [0, 0, 1, 1], [], []>} : vector<128x128xbf16>, vector<128x128xbf16>, vector<128x128xf32> -> vector<128x128xf32>
    %cst_17 = arith.constant 0.899999976 : f32
    %23 = vector.broadcast %cst_17 : f32 to vector<128x128xf32>
    %24 = arith.mulf %23, %22 : vector<128x128xf32>
    %25 = arith.addf %24, %14 : vector<128x128xf32>
    %c2_i32 = arith.constant 2 : i32
    %26 = arith.truncf %25 : vector<128x128xf32> to vector<128x128xbf16>
    %cst_18 = arith.constant dense<0.000000e+00> : vector<128x128xf32>
    %27 = tpu.matmul %15, %26, %cst_18 {dimension_numbers = #tpu.dot_dimension_numbers<[1], [0], [0], [1], [0, 0, 1, 1], [], []>} : vector<128x128xbf16>, vector<128x128xbf16>, vector<128x128xf32> -> vector<128x128xf32>
    %cst_19 = arith.constant 0.899999976 : f32
    %28 = vector.broadcast %cst_19 : f32 to vector<128x128xf32>
    %29 = arith.mulf %28, %27 : vector<128x128xf32>
    %30 = arith.addf %29, %14 : vector<128x128xf32>
    %c3_i32 = arith.constant 3 : i32
    %31 = arith.truncf %30 : vector<128x128xf32> to vector<128x128xbf16>
    %cst_20 = arith.constant dense<0.000000e+00> : vector<128x128xf32>
    %32 = tpu.matmul %15, %31, %cst_20 {dimension_numbers = #tpu.dot_dimension_numbers<[1], [0], [0], [1], [0, 0, 1, 1], [], []>} : vector<128x128xbf16>, vector<128x128xbf16>, vector<128x128xf32> -> vector<128x128xf32>
    %cst_21 = arith.constant 0.899999976 : f32
    %33 = vector.broadcast %cst_21 : f32 to vector<128x128xf32>
    %34 = arith.mulf %33, %32 : vector<128x128xf32>
    %35 = arith.addf %34, %14 : vector<128x128xf32>
    %c4_i32 = arith.constant 4 : i32
    %36 = arith.truncf %35 : vector<128x128xf32> to vector<128x128xbf16>
    %cst_22 = arith.constant dense<0.000000e+00> : vector<128x128xf32>
    %37 = tpu.matmul %15, %36, %cst_22 {dimension_numbers = #tpu.dot_dimension_numbers<[1], [0], [0], [1], [0, 0, 1, 1], [], []>} : vector<128x128xbf16>, vector<128x128xbf16>, vector<128x128xf32> -> vector<128x128xf32>
    %cst_23 = arith.constant 0.899999976 : f32
    %38 = vector.broadcast %cst_23 : f32 to vector<128x128xf32>
    %39 = arith.mulf %38, %37 : vector<128x128xf32>
    %40 = arith.addf %39, %14 : vector<128x128xf32>
    %c5_i32 = arith.constant 5 : i32
    %41 = arith.truncf %40 : vector<128x128xf32> to vector<128x128xbf16>
    %cst_24 = arith.constant dense<0.000000e+00> : vector<128x128xf32>
    %42 = tpu.matmul %15, %41, %cst_24 {dimension_numbers = #tpu.dot_dimension_numbers<[1], [0], [0], [1], [0, 0, 1, 1], [], []>} : vector<128x128xbf16>, vector<128x128xbf16>, vector<128x128xf32> -> vector<128x128xf32>
    %cst_25 = arith.constant 0.899999976 : f32
    %43 = vector.broadcast %cst_25 : f32 to vector<128x128xf32>
    %44 = arith.mulf %43, %42 : vector<128x128xf32>
    %45 = arith.addf %44, %14 : vector<128x128xf32>
    %c6_i32 = arith.constant 6 : i32
    %46 = arith.truncf %45 : vector<128x128xf32> to vector<128x128xbf16>
    %cst_26 = arith.constant dense<0.000000e+00> : vector<128x128xf32>
    %47 = tpu.matmul %15, %46, %cst_26 {dimension_numbers = #tpu.dot_dimension_numbers<[1], [0], [0], [1], [0, 0, 1, 1], [], []>} : vector<128x128xbf16>, vector<128x128xbf16>, vector<128x128xf32> -> vector<128x128xf32>
    %cst_27 = arith.constant 0.899999976 : f32
    %48 = vector.broadcast %cst_27 : f32 to vector<128x128xf32>
    %49 = arith.mulf %48, %47 : vector<128x128xf32>
    %50 = arith.addf %49, %14 : vector<128x128xf32>
    %c7_i32 = arith.constant 7 : i32
    %51 = arith.truncf %50 : vector<128x128xf32> to vector<128x128xbf16>
    %cst_28 = arith.constant dense<0.000000e+00> : vector<128x128xf32>
    %52 = tpu.matmul %15, %51, %cst_28 {dimension_numbers = #tpu.dot_dimension_numbers<[1], [0], [0], [1], [0, 0, 1, 1], [], []>} : vector<128x128xbf16>, vector<128x128xbf16>, vector<128x128xf32> -> vector<128x128xf32>
    %cst_29 = arith.constant 0.899999976 : f32
    %53 = vector.broadcast %cst_29 : f32 to vector<128x128xf32>
    %54 = arith.mulf %53, %52 : vector<128x128xf32>
    %55 = arith.addf %54, %14 : vector<128x128xf32>
    %c8_i32 = arith.constant 8 : i32
    %56 = arith.truncf %55 : vector<128x128xf32> to vector<128x128xbf16>
    %cst_30 = arith.constant dense<0.000000e+00> : vector<128x128xf32>
    %57 = tpu.matmul %15, %56, %cst_30 {dimension_numbers = #tpu.dot_dimension_numbers<[1], [0], [0], [1], [0, 0, 1, 1], [], []>} : vector<128x128xbf16>, vector<128x128xbf16>, vector<128x128xf32> -> vector<128x128xf32>
    %cst_31 = arith.constant 0.899999976 : f32
    %58 = vector.broadcast %cst_31 : f32 to vector<128x128xf32>
    %59 = arith.mulf %58, %57 : vector<128x128xf32>
    %60 = arith.addf %59, %14 : vector<128x128xf32>
    %c9_i32 = arith.constant 9 : i32
    %61 = arith.truncf %60 : vector<128x128xf32> to vector<128x128xbf16>
    %cst_32 = arith.constant dense<0.000000e+00> : vector<128x128xf32>
    %62 = tpu.matmul %15, %61, %cst_32 {dimension_numbers = #tpu.dot_dimension_numbers<[1], [0], [0], [1], [0, 0, 1, 1], [], []>} : vector<128x128xbf16>, vector<128x128xbf16>, vector<128x128xf32> -> vector<128x128xf32>
    %cst_33 = arith.constant 0.899999976 : f32
    %63 = vector.broadcast %cst_33 : f32 to vector<128x128xf32>
    %64 = arith.mulf %63, %62 : vector<128x128xf32>
    %65 = arith.addf %64, %14 : vector<128x128xf32>
    %c0_34 = arith.constant 0 : index
    %c0_35 = arith.constant 0 : index
    %66 = vector.load %arg6[%c0_34, %c0_35] : memref<128x128xf32, #tpu.memory_space<vmem>>, vector<128x128xf32>
    tpu.vector_store %arg6[%c0_34, %c0_35], %65 {strides = array<i32>} : memref<128x128xf32, #tpu.memory_space<vmem>>, vector<128x128xf32>,
    return
  }
}

</mosaic_0001>

<llo_original>
// kernel: tpu_custom_call.1
$region0: #{tpu_custom_call.1}
  #allocation0 [shape = 'u32[]', space=smem, size = 0x4, offset = 0x4, fixed_abs, tag = 'smem constant byte address 0x4 - core index']
  #allocation1 [shape = 'u32[72,128]{1,0:T(1,128)}', space=vmem, size = 0x9000, scoped, tag = 'internal scratch']
  #allocation2 [shape = 'bf16[128,128]{1,0:T(8,128)(2,1)}', space=vmem, size = 0x8000, scoped, tag = 'scratch operand']
  #allocation3 [shape = 's32[1]{0}', space=sflag, size = 0x4, scoped, tag = 'scratch operand']
  #allocation11 [shape = 's32[]', space=sflag, size = 0x4, offset = 0, fixed_abs, tag = 'sflag constant byte address 0x0 - dummy sync flag']
  #allocation12 [shape = 's32[]', space=sflag, size = 0x4, offset = 0, fixed_abs, tag = 'sflag constant byte address 0x0 - dummy sync flag']
  #allocation13 [shape = 'u32[]', space=smem, size = 0x4, offset = 0x44, fixed_abs, tag = 'smem constant byte address 0x44 - assertion arg 0']
  #allocation14 [shape = 'u32[]', space=smem, size = 0x4, offset = 0x48, fixed_abs, tag = 'smem constant byte address 0x48 - assertion arg 1']
  %s0 = inlined_call_operand.hbm [shape: f32[128,128], index: 0, kind: input, shape index: {}]
  %s1 = inlined_call_operand.hbm [shape: f32[128,128], index: 1, kind: input, shape index: {}]
  %s2 = inlined_call_operand.vmem [shape: f32[1,128], index: 2, kind: input, shape index: {}]
  %s3 = inlined_call_operand.hbm [shape: f32[128,128], index: 3, kind: input, shape index: {}]
  %s4 = inlined_call_operand.vmem [shape: f32[1,128], index: 4, kind: input, shape index: {}]
  %s5 = inlined_call_operand.hbm [shape: bf16[128,128], index: 5, kind: input, shape index: {}]
  %s6 = inlined_call_operand.hbm [shape: f32[128,128], index: 6, kind: output, shape index: {}]
  %s7 = sld [smem:[#allocation0]]
  $region46: #{tpu_custom_call.1} parent=0
    _
  %s9 = ssub.s32 1, %s7
  %s10 = scalar_select 0, %s9, %s7
  $region1: #{tpu_custom_call.1} parent=0
    #allocation4 [shape = 'u8[65536]{0}', space=vmem, size = 0x10000, scoped, tag = 'input window, operand 0, single buffered']
    #allocation5 [shape = 's32[1]{0}', space=sflag, size = 0x4, scoped, tag = 'scoped memory for tpu_custom_call.1']
    #allocation6 [shape = 's32[1]{0}', space=sflag, size = 0x4, scoped, tag = 'scoped memory for tpu_custom_call.1']
    #allocation7 [shape = 'u8[65536]{0}', space=vmem, size = 0x10000, scoped, tag = 'input window, operand 1, single buffered']
    #allocation8 [shape = 's32[1]{0}', space=sflag, size = 0x4, scoped, tag = 'scoped memory for tpu_custom_call.1']
    #allocation9 [shape = 'u8[65536]{0}', space=vmem, size = 0x10000, scoped, tag = 'input window, operand 3, single buffered']
    #allocation10 [shape = 'u8[65536]{0}', space=vmem, size = 0x10000, scoped, tag = 'output window, operand 0, single buffered']
    %11 = vsyncpa [#allocation5], 0
    %12 = vsyncpa [#allocation8], 0
    %13 = vsyncpa [#allocation6], 0
    // Predicated region
    $region2: #{tpu_custom_call.1} parent=1 // pred_check
      _
    $region3: #{tpu_custom_call.1} parent=1 // pred_check_branch
      %15 = sbr.rel (0) target = $region5
    $region4: #{tpu_custom_call.1} parent=1 // pred_region
      %17 = vsyncadd [#allocation5], 0
      %s18 = sshll.u32 %s0, 4
      %s19 = int_to_ptr.hbm [resolvable:$true] %s18
      %s20 = sshll.u32 [#allocation4], 4
      %s21 = int_to_ptr.vmem [resolvable:$true] %s20
      %26 = dma.hbm_to_vmem [thread:$0]  %s19, 2048, %s21, [#allocation5], 128, 128, 8
    $region5: #{tpu_custom_call.1} parent=1 // pred_fallthru
      _
    // Predicated region
    $region6: #{tpu_custom_call.1} parent=1 // pred_check
      _
    $region7: #{tpu_custom_call.1} parent=1 // pred_check_branch
      %28 = sbr.rel (0) target = $region9
    $region8: #{tpu_custom_call.1} parent=1 // pred_region
      %30 = vsyncadd [#allocation8], 0
      %s31 = sshll.u32 %s1, 4
      %s32 = int_to_ptr.hbm [resolvable:$true] %s31
      %s33 = sshll.u32 [#allocation7], 4
      %s34 = int_to_ptr.vmem [resolvable:$true] %s33
      %39 = dma.hbm_to_vmem [thread:$0]  %s32, 2048, %s34, [#allocation8], 128, 128, 8
    $region9: #{tpu_custom_call.1} parent=1 // pred_fallthru
      _
    // Predicated region
    $region10: #{tpu_custom_call.1} parent=1 // pred_check
      _
    $region11: #{tpu_custom_call.1} parent=1 // pred_check_branch
      %41 = sbr.rel (0) target = $region13
    $region12: #{tpu_custom_call.1} parent=1 // pred_region
      _
    $region13: #{tpu_custom_call.1} parent=1 // pred_fallthru
      _
    // Predicated region
    $region14: #{tpu_custom_call.1} parent=1 // pred_check
      _
    $region15: #{tpu_custom_call.1} parent=1 // pred_check_branch
      %43 = sbr.rel (0) target = $region17
    $region16: #{tpu_custom_call.1} parent=1 // pred_region
      %45 = vsyncadd [#allocation8], 0
      %s46 = sshll.u32 %s3, 4
      %s47 = int_to_ptr.hbm [resolvable:$true] %s46
      %s48 = sshll.u32 [#allocation9], 4
      %s49 = int_to_ptr.vmem [resolvable:$true] %s48
      %54 = dma.hbm_to_vmem [thread:$0]  %s47, 2048, %s49, [#allocation8], 128, 128, 8
    $region17: #{tpu_custom_call.1} parent=1 // pred_fallthru
      _
    // Predicated region
    $region18: #{tpu_custom_call.1} parent=1 // pred_check
      _
    $region19: #{tpu_custom_call.1} parent=1 // pred_check_branch
      %56 = sbr.rel (0) target = $region21
    $region20: #{tpu_custom_call.1} parent=1 // pred_region
      _
    $region21: #{tpu_custom_call.1} parent=1 // pred_fallthru
      _
    // Predicated region
    $region22: #{tpu_custom_call.1} parent=1 // pred_check
      _
    $region23: #{tpu_custom_call.1} parent=1 // pred_check_branch
      %58 = sbr.rel (0) target = $region25
    $region24: #{tpu_custom_call.1} parent=1 // pred_region
      %60 = dma.done [#allocation5], 2048
    $region25: #{tpu_custom_call.1} parent=1 // pred_fallthru
      _
    // Predicated region
    $region26: #{tpu_custom_call.1} parent=1 // pred_check
      _
    $region27: #{tpu_custom_call.1} parent=1 // pred_check_branch
      %62 = sbr.rel (0) target = $region29
    $region28: #{tpu_custom_call.1} parent=1 // pred_region
      %64 = dma.done [#allocation8], 2048
    $region29: #{tpu_custom_call.1} parent=1 // pred_fallthru
      _
    // Predicated region
    $region30: #{tpu_custom_call.1} parent=1 // pred_check
      _
    $region31: #{tpu_custom_call.1} parent=1 // pred_check_branch
      %66 = sbr.rel (0) target = $region33
    $region32: #{tpu_custom_call.1} parent=1 // pred_region
      %68 = dma.done [#allocation8], 2048
    $region33: #{tpu_custom_call.1} parent=1 // pred_fallthru
      _
    // Predicated region
    $region34: #{tpu_custom_call.1} parent=1 // pred_check
      _
    $region35: #{tpu_custom_call.1} parent=1 // pred_check_branch
      %70 = sbr.rel target = $region37
    $region36: #{tpu_custom_call.1} parent=1 // pred_region
      %71 = sst [smem:[#allocation13]] [#allocation12]
      %72 = sst [smem:[#allocation14]] [#allocation11]
    $region37: #{tpu_custom_call.1} parent=1 // pred_fallthru
      _
    %74 = shalt.err (0)
    %s76 = sshll.u32 %s5, 4
    %s77 = int_to_ptr.hbm [resolvable:$true] %s76
    %s78 = sshll.u32 [#allocation2], 4
    %s79 = int_to_ptr.vmem [resolvable:$true] %s78
    %81 = dma.hbm_to_vmem [thread:$0]  %s77, 1024, %s79, [#allocation3]
    %v82 = vld [vmem:[#allocation4] sm:$0xff]
    %v83 = vld [vmem:[#allocation4 + $0x8] sm:$0xff]
    %v84 = vld [vmem:[#allocation4 + $0x10] sm:$0xff]
    %v85 = vld [vmem:[#allocation4 + $0x18] sm:$0xff]
    %v86 = vld [vmem:[#allocation4 + $0x20] sm:$0xff]
    %v87 = vld [vmem:[#allocation4 + $0x28] sm:$0xff]
    %v88 = vld [vmem:[#allocation4 + $0x30] sm:$0xff]
    %v89 = vld [vmem:[#allocation4 + $0x38] sm:$0xff]
    %v90 = vld [vmem:[#allocation4 + $0x40] sm:$0xff]
    %v91 = vld [vmem:[#allocation4 + $0x48] sm:$0xff]
    %v92 = vld [vmem:[#allocation4 + $0x50] sm:$0xff]
    %v93 = vld [vmem:[#allocation4 + $0x58] sm:$0xff]
    %v94 = vld [vmem:[#allocation4 + $0x60] sm:$0xff]
    %v95 = vld [vmem:[#allocation4 + $0x68] sm:$0xff]
    %v96 = vld [vmem:[#allocation4 + $0x70] sm:$0xff]
    %v97 = vld [vmem:[#allocation4 + $0x78] sm:$0xff]
    %v98 = vld [vmem:[#allocation7] sm:$0xff]
    %v99 = vld [vmem:[#allocation7 + $0x8] sm:$0xff]
    %v100 = vld [vmem:[#allocation7 + $0x10] sm:$0xff]
    %v101 = vld [vmem:[#allocation7 + $0x18] sm:$0xff]
    %v102 = vld [vmem:[#allocation7 + $0x20] sm:$0xff]
    %v103 = vld [vmem:[#allocation7 + $0x28] sm:$0xff]
    %v104 = vld [vmem:[#allocation7 + $0x30] sm:$0xff]
    %v105 = vld [vmem:[#allocation7 + $0x38] sm:$0xff]
    %v106 = vld [vmem:[#allocation7 + $0x40] sm:$0xff]
    %v107 = vld [vmem:[#allocation7 + $0x48] sm:$0xff]
    %v108 = vld [vmem:[#allocation7 + $0x50] sm:$0xff]
    %v109 = vld [vmem:[#allocation7 + $0x58] sm:$0xff]
    %v110 = vld [vmem:[#allocation7 + $0x60] sm:$0xff]
    %v111 = vld [vmem:[#allocation7 + $0x68] sm:$0xff]
    %v112 = vld [vmem:[#allocation7 + $0x70] sm:$0xff]
    %v113 = vld [vmem:[#allocation7 + $0x78] sm:$0xff]
    %v114 = vld [vmem:[%s2] sm:$0x1]
    %v116 = vperm.slane %v114, 0
    %118 = vmatpush.msra.mxu0 %v113
    %119 = vmatpush.msra.mxu0 %v112
    %120 = vmatpush.msra.mxu0 %v111
    %121 = vmatpush.msra.mxu0 %v110
    %122 = vmatpush.msra.mxu0 %v109
    %123 = vmatpush.msra.mxu0 %v108
    %124 = vmatpush.msra.mxu0 %v107
    %125 = vmatpush.msra.mxu0 %v106
    %126 = vmatpush.msra.mxu0 %v105
    %127 = vmatpush.msra.mxu0 %v104
    %128 = vmatpush.msra.mxu0 %v103
    %129 = vmatpush.msra.mxu0 %v102
    %130 = vmatpush.msra.mxu0 %v101
    %131 = vmatpush.msra.mxu0 %v100
    %132 = vmatpush.msra.mxu0 %v99
    %133 = vmatpush.msra.mxu0 %v98
    %134 = vmatmul.f32.gmra.mxu0 %v82
    %v135 = vpop.f32.mrf.mxu0
    %v136 = vadd.f32 %v116, %v135
    %137 = vmatmul.f32.gmra.mxu0 %v83
    %v138 = vpop.f32.mrf.mxu0
    %v139 = vadd.f32 %v116, %v138
    %140 = vmatmul.f32.gmra.mxu0 %v84
    %v141 = vpop.f32.mrf.mxu0
    %v142 = vadd.f32 %v116, %v141
    %143 = vmatmul.f32.gmra.mxu0 %v85
    %v144 = vpop.f32.mrf.mxu0
    %v145 = vadd.f32 %v116, %v144
    %146 = vmatmul.f32.gmra.mxu0 %v86
    %v147 = vpop.f32.mrf.mxu0
    %v148 = vadd.f32 %v116, %v147
    %149 = vmatmul.f32.gmra.mxu0 %v87
    %v150 = vpop.f32.mrf.mxu0
    %v151 = vadd.f32 %v116, %v150
    %152 = vmatmul.f32.gmra.mxu0 %v88
    %v153 = vpop.f32.mrf.mxu0
    %v154 = vadd.f32 %v116, %v153
    %155 = vmatmul.f32.gmra.mxu0 %v89
    %v156 = vpop.f32.mrf.mxu0
    %v157 = vadd.f32 %v116, %v156
    %158 = vmatmul.f32.gmra.mxu0 %v90
    %v159 = vpop.f32.mrf.mxu0
    %v160 = vadd.f32 %v116, %v159
    %161 = vmatmul.f32.gmra.mxu0 %v91
    %v162 = vpop.f32.mrf.mxu0
    %v163 = vadd.f32 %v116, %v162
    %164 = vmatmul.f32.gmra.mxu0 %v92
    %v165 = vpop.f32.mrf.mxu0
    %v166 = vadd.f32 %v116, %v165
    %167 = vmatmul.f32.gmra.mxu0 %v93
    %v168 = vpop.f32.mrf.mxu0
    %v169 = vadd.f32 %v116, %v168
    %170 = vmatmul.f32.gmra.mxu0 %v94
    %v171 = vpop.f32.mrf.mxu0
    %v172 = vadd.f32 %v116, %v171
    %173 = vmatmul.f32.gmra.mxu0 %v95
    %v174 = vpop.f32.mrf.mxu0
    %v175 = vadd.f32 %v116, %v174
    %176 = vmatmul.f32.gmra.mxu0 %v96
    %v177 = vpop.f32.mrf.mxu0
    %v178 = vadd.f32 %v116, %v177
    %179 = vmatmul.f32.gmra.mxu0 %v97
    %v180 = vpop.f32.mrf.mxu0
    %v181 = vadd.f32 %v116, %v180
    %182 = vdwg.mxu0
    %v183 = vmax.f32 %v136, 0.0
    %v184 = vmax.f32 %v139, 0.0
    %v185 = vmax.f32 %v142, 0.0
    %v186 = vmax.f32 %v145, 0.0
    %v187 = vmax.f32 %v148, 0.0
    %v188 = vmax.f32 %v151, 0.0
    %v189 = vmax.f32 %v154, 0.0
    %v190 = vmax.f32 %v157, 0.0
    %v191 = vmax.f32 %v160, 0.0
    %v192 = vmax.f32 %v163, 0.0
    %v193 = vmax.f32 %v166, 0.0
    %v194 = vmax.f32 %v169, 0.0
    %v195 = vmax.f32 %v172, 0.0
    %v196 = vmax.f32 %v175, 0.0
    %v197 = vmax.f32 %v178, 0.0
    %v198 = vmax.f32 %v181, 0.0
    %v199 = vld [vmem:[#allocation9] sm:$0xff]
    %v200 = vld [vmem:[#allocation9 + $0x8] sm:$0xff]
    %v201 = vld [vmem:[#allocation9 + $0x10] sm:$0xff]
    %v202 = vld [vmem:[#allocation9 + $0x18] sm:$0xff]
    %v203 = vld [vmem:[#allocation9 + $0x20] sm:$0xff]
    %v204 = vld [vmem:[#allocation9 + $0x28] sm:$0xff]
    %v205 = vld [vmem:[#allocation9 + $0x30] sm:$0xff]
    %v206 = vld [vmem:[#allocation9 + $0x38] sm:$0xff]
    %v207 = vld [vmem:[#allocation9 + $0x40] sm:$0xff]
    %v208 = vld [vmem:[#allocation9 + $0x48] sm:$0xff]
    %v209 = vld [vmem:[#allocation9 + $0x50] sm:$0xff]
    %v210 = vld [vmem:[#allocation9 + $0x58] sm:$0xff]
    %v211 = vld [vmem:[#allocation9 + $0x60] sm:$0xff]
    %v212 = vld [vmem:[#allocation9 + $0x68] sm:$0xff]
    %v213 = vld [vmem:[#allocation9 + $0x70] sm:$0xff]
    %v214 = vld [vmem:[#allocation9 + $0x78] sm:$0xff]
    %v215 = vld [vmem:[%s4] sm:$0x1]
    %v217 = vperm.slane %v215, 0
    %219 = vmatpush.msra.mxu0 %v214
    %220 = vmatpush.msra.mxu0 %v213
    %221 = vmatpush.msra.mxu0 %v212
    %222 = vmatpush.msra.mxu0 %v211
    %223 = vmatpush.msra.mxu0 %v210
    %224 = vmatpush.msra.mxu0 %v209
    %225 = vmatpush.msra.mxu0 %v208
    %226 = vmatpush.msra.mxu0 %v207
    %227 = vmatpush.msra.mxu0 %v206
    %228 = vmatpush.msra.mxu0 %v205
    %229 = vmatpush.msra.mxu0 %v204
    %230 = vmatpush.msra.mxu0 %v203
    %231 = vmatpush.msra.mxu0 %v202
    %232 = vmatpush.msra.mxu0 %v201
    %233 = vmatpush.msra.mxu0 %v200
    %234 = vmatpush.msra.mxu0 %v199
    %235 = vmatmul.f32.gmra.mxu0 %v183
    %v236 = vpop.f32.mrf.mxu0
    %v237 = vadd.f32 %v217, %v236
    %238 = vmatmul.f32.gmra.mxu0 %v184
    %v239 = vpop.f32.mrf.mxu0
    %v240 = vadd.f32 %v217, %v239
    %241 = vmatmul.f32.gmra.mxu0 %v185
    %v242 = vpop.f32.mrf.mxu0
    %v243 = vadd.f32 %v217, %v242
    %244 = vmatmul.f32.gmra.mxu0 %v186
    %v245 = vpop.f32.mrf.mxu0
    %v246 = vadd.f32 %v217, %v245
    %247 = vmatmul.f32.gmra.mxu0 %v187
    %v248 = vpop.f32.mrf.mxu0
    %v249 = vadd.f32 %v217, %v248
    %250 = vmatmul.f32.gmra.mxu0 %v188
    %v251 = vpop.f32.mrf.mxu0
    %v252 = vadd.f32 %v217, %v251
    %253 = vmatmul.f32.gmra.mxu0 %v189
    %v254 = vpop.f32.mrf.mxu0
    %v255 = vadd.f32 %v217, %v254
    %256 = vmatmul.f32.gmra.mxu0 %v190
    %v257 = vpop.f32.mrf.mxu0
    %v258 = vadd.f32 %v217, %v257
    %259 = vmatmul.f32.gmra.mxu0 %v191
    %v260 = vpop.f32.mrf.mxu0
    %v261 = vadd.f32 %v217, %v260
    %262 = vmatmul.f32.gmra.mxu0 %v192
    %v263 = vpop.f32.mrf.mxu0
    %v264 = vadd.f32 %v217, %v263
    %265 = vmatmul.f32.gmra.mxu0 %v193
    %v266 = vpop.f32.mrf.mxu0
    %v267 = vadd.f32 %v217, %v266
    %268 = vmatmul.f32.gmra.mxu0 %v194
    %v269 = vpop.f32.mrf.mxu0
    %v270 = vadd.f32 %v217, %v269
    %271 = vmatmul.f32.gmra.mxu0 %v195
    %v272 = vpop.f32.mrf.mxu0
    %v273 = vadd.f32 %v217, %v272
    %274 = vmatmul.f32.gmra.mxu0 %v196
    %v275 = vpop.f32.mrf.mxu0
    %v276 = vadd.f32 %v217, %v275
    %277 = vmatmul.f32.gmra.mxu0 %v197
    %v278 = vpop.f32.mrf.mxu0
    %v279 = vadd.f32 %v217, %v278
    %280 = vmatmul.f32.gmra.mxu0 %v198
    %v281 = vpop.f32.mrf.mxu0
    %v282 = vadd.f32 %v217, %v281
    %283 = vdwg.mxu0
    %v284 = vmul.f32 %v237, 0.1
    %v285 = vmul.f32 %v240, 0.1
    %v286 = vmul.f32 %v243, 0.1
    %v287 = vmul.f32 %v246, 0.1
    %v288 = vmul.f32 %v249, 0.1
    %v289 = vmul.f32 %v252, 0.1
    %v290 = vmul.f32 %v255, 0.1
    %v291 = vmul.f32 %v258, 0.1
    %v292 = vmul.f32 %v261, 0.1
    %v293 = vmul.f32 %v264, 0.1
    %v294 = vmul.f32 %v267, 0.1
    %v295 = vmul.f32 %v270, 0.1
    %v296 = vmul.f32 %v273, 0.1
    %v297 = vmul.f32 %v276, 0.1
    %v298 = vmul.f32 %v279, 0.1
    %v299 = vmul.f32 %v282, 0.1
    %s300 = smul.u32 4, 16
    %s301 = smul.u32 %s300, 1
    %s302 = sshll.u32 %s301, 4
    %303 = dma.done [#allocation3], %s302
    %v304 = vld [vmem:[#allocation2] sm:$0xf]
    %v305 = vld [vmem:[#allocation2 + $0x4] sm:$0xf]
    %v306 = vld [vmem:[#allocation2 + $0x8] sm:$0xf]
    %v307 = vld [vmem:[#allocation2 + $0xc] sm:$0xf]
    %v308 = vld [vmem:[#allocation2 + $0x10] sm:$0xf]
    %v309 = vld [vmem:[#allocation2 + $0x14] sm:$0xf]
    %v310 = vld [vmem:[#allocation2 + $0x18] sm:$0xf]
    %v311 = vld [vmem:[#allocation2 + $0x1c] sm:$0xf]
    %v312 = vld [vmem:[#allocation2 + $0x20] sm:$0xf]
    %v313 = vld [vmem:[#allocation2 + $0x24] sm:$0xf]
    %v314 = vld [vmem:[#allocation2 + $0x28] sm:$0xf]
    %v315 = vld [vmem:[#allocation2 + $0x2c] sm:$0xf]
    %v316 = vld [vmem:[#allocation2 + $0x30] sm:$0xf]
    %v317 = vld [vmem:[#allocation2 + $0x34] sm:$0xf]
    %v318 = vld [vmem:[#allocation2 + $0x38] sm:$0xf]
    %v319 = vld [vmem:[#allocation2 + $0x3c] sm:$0xf]
    %v320 = vpack.c.bf16 %v240, %v237
    %v321 = vpack.c.bf16 %v246, %v243
    %v322 = vpack.c.bf16 %v252, %v249
    %v323 = vpack.c.bf16 %v258, %v255
    %v324 = vpack.c.bf16 %v264, %v261
    %v325 = vpack.c.bf16 %v270, %v267
    %v326 = vpack.c.bf16 %v276, %v273
    %v327 = vpack.c.bf16 %v282, %v279
    %v344 = vunpack.c.l.b16 %v304
    %v345 = vunpack.c.l.b16 %v305
    %v346 = vunpack.c.l.b16 %v306
    %v347 = vunpack.c.l.b16 %v307
    %v348 = vunpack.c.l.b16 %v308
    %v349 = vunpack.c.l.b16 %v309
    %v350 = vunpack.c.l.b16 %v310
    %v351 = vunpack.c.l.b16 %v311
    %v352 = vunpack.c.l.b16 %v312
    %v353 = vunpack.c.l.b16 %v313
    %v354 = vunpack.c.l.b16 %v314
    %v355 = vunpack.c.l.b16 %v315
    %v356 = vunpack.c.l.b16 %v316
    %v357 = vunpack.c.l.b16 %v317
    %v358 = vunpack.c.l.b16 %v318
    %v359 = vunpack.c.l.b16 %v319
    %v360 = vpack.c.b16 %v345, %v344
    %v361 = vpack.c.b16 %v347, %v346
    %v362 = vpack.c.b16 %v349, %v348
    %v363 = vpack.c.b16 %v351, %v350
    %v364 = vpack.c.b16 %v353, %v352
    %v365 = vpack.c.b16 %v355, %v354
    %v366 = vpack.c.b16 %v357, %v356
    %v367 = vpack.c.b16 %v359, %v358
    %376 = vmatpush.bf16.msra.mxu0 %v327
    %377 = vmatpush.bf16.msra.mxu0 %v326
    %378 = vmatpush.bf16.msra.mxu0 %v325
    %379 = vmatpush.bf16.msra.mxu0 %v324
    %380 = vmatpush.bf16.msra.mxu0 %v323
    %381 = vmatpush.bf16.msra.mxu0 %v322
    %382 = vmatpush.bf16.msra.mxu0 %v321
    %383 = vmatpush.bf16.msra.mxu0 %v320
    %384 = vmatmul.bf16.gmra.mxu0 %v360
    %v385 = vpop.f32.mrf.mxu0
    %v386 = vadd.f32 0.0, %v385
    %v387 = vpop.f32.mrf.mxu0
    %v388 = vadd.f32 0.0, %v387
    %389 = vmatmul.bf16.gmra.mxu0 %v361
    %v390 = vpop.f32.mrf.mxu0
    %v391 = vadd.f32 0.0, %v390
    %v392 = vpop.f32.mrf.mxu0
    %v393 = vadd.f32 0.0, %v392
    %394 = vmatmul.bf16.gmra.mxu0 %v362
    %v395 = vpop.f32.mrf.mxu0
    %v396 = vadd.f32 0.0, %v395
    %v397 = vpop.f32.mrf.mxu0
    %v398 = vadd.f32 0.0, %v397
    %399 = vmatmul.bf16.gmra.mxu0 %v363
    %v400 = vpop.f32.mrf.mxu0
    %v401 = vadd.f32 0.0, %v400
    %v402 = vpop.f32.mrf.mxu0
    %v403 = vadd.f32 0.0, %v402
    %404 = vmatmul.bf16.gmra.mxu0 %v364
    %v405 = vpop.f32.mrf.mxu0
    %v406 = vadd.f32 0.0, %v405
    %v407 = vpop.f32.mrf.mxu0
    %v408 = vadd.f32 0.0, %v407
    %409 = vmatmul.bf16.gmra.mxu0 %v365
    %v410 = vpop.f32.mrf.mxu0
    %v411 = vadd.f32 0.0, %v410
    %v412 = vpop.f32.mrf.mxu0
    %v413 = vadd.f32 0.0, %v412
    %414 = vmatmul.bf16.gmra.mxu0 %v366
    %v415 = vpop.f32.mrf.mxu0
    %v416 = vadd.f32 0.0, %v415
    %v417 = vpop.f32.mrf.mxu0
    %v418 = vadd.f32 0.0, %v417
    %419 = vmatmul.bf16.gmra.mxu0 %v367
    %v420 = vpop.f32.mrf.mxu0
    %v421 = vadd.f32 0.0, %v420
    %v422 = vpop.f32.mrf.mxu0
    %v423 = vadd.f32 0.0, %v422
    %424 = vdwg.mxu0
    %v425 = vmul.f32 %v386, 0.9
    %v426 = vmul.f32 %v388, 0.9
    %v427 = vmul.f32 %v391, 0.9
    %v428 = vmul.f32 %v393, 0.9
    %v429 = vmul.f32 %v396, 0.9
    %v430 = vmul.f32 %v398, 0.9
    %v431 = vmul.f32 %v401, 0.9
    %v432 = vmul.f32 %v403, 0.9
    %v433 = vmul.f32 %v406, 0.9
    %v434 = vmul.f32 %v408, 0.9
    %v435 = vmul.f32 %v411, 0.9
    %v436 = vmul.f32 %v413, 0.9
    %v437 = vmul.f32 %v416, 0.9
    %v438 = vmul.f32 %v418, 0.9
    %v439 = vmul.f32 %v421, 0.9
    %v440 = vmul.f32 %v423, 0.9
    %v441 = vadd.f32 %v425, %v284
    %v442 = vadd.f32 %v426, %v285
    %v443 = vadd.f32 %v427, %v286
    %v444 = vadd.f32 %v428, %v287
    %v445 = vadd.f32 %v429, %v288
    %v446 = vadd.f32 %v430, %v289
    %v447 = vadd.f32 %v431, %v290
    %v448 = vadd.f32 %v432, %v291
    %v449 = vadd.f32 %v433, %v292
    %v450 = vadd.f32 %v434, %v293
    %v451 = vadd.f32 %v435, %v294
    %v452 = vadd.f32 %v436, %v295
    %v453 = vadd.f32 %v437, %v296
    %v454 = vadd.f32 %v438, %v297
    %v455 = vadd.f32 %v439, %v298
    %v456 = vadd.f32 %v440, %v299
    %v457 = vpack.c.bf16 %v442, %v441
    %v458 = vpack.c.bf16 %v444, %v443
    %v459 = vpack.c.bf16 %v446, %v445
    %v460 = vpack.c.bf16 %v448, %v447
    %v461 = vpack.c.bf16 %v450, %v449
    %v462 = vpack.c.bf16 %v452, %v451
    %v463 = vpack.c.bf16 %v454, %v453
    %v464 = vpack.c.bf16 %v456, %v455
    %465 = vmatpush.bf16.msra.mxu0 %v464
    %466 = vmatpush.bf16.msra.mxu0 %v463
    %467 = vmatpush.bf16.msra.mxu0 %v462
    %468 = vmatpush.bf16.msra.mxu0 %v461
    %469 = vmatpush.bf16.msra.mxu0 %v460
    %470 = vmatpush.bf16.msra.mxu0 %v459
    %471 = vmatpush.bf16.msra.mxu0 %v458
    %472 = vmatpush.bf16.msra.mxu0 %v457
    %473 = vmatmul.bf16.gmra.mxu0 %v360
    %v474 = vpop.f32.mrf.mxu0
    %v475 = vadd.f32 0.0, %v474
    %v476 = vpop.f32.mrf.mxu0
    %v477 = vadd.f32 0.0, %v476
    %478 = vmatmul.bf16.gmra.mxu0 %v361
    %v479 = vpop.f32.mrf.mxu0
    %v480 = vadd.f32 0.0, %v479
    %v481 = vpop.f32.mrf.mxu0
    %v482 = vadd.f32 0.0, %v481
    %483 = vmatmul.bf16.gmra.mxu0 %v362
    %v484 = vpop.f32.mrf.mxu0
    %v485 = vadd.f32 0.0, %v484
    %v486 = vpop.f32.mrf.mxu0
    %v487 = vadd.f32 0.0, %v486
    %488 = vmatmul.bf16.gmra.mxu0 %v363
    %v489 = vpop.f32.mrf.mxu0
    %v490 = vadd.f32 0.0, %v489
    %v491 = vpop.f32.mrf.mxu0
    %v492 = vadd.f32 0.0, %v491
    %493 = vmatmul.bf16.gmra.mxu0 %v364
    %v494 = vpop.f32.mrf.mxu0
    %v495 = vadd.f32 0.0, %v494
    %v496 = vpop.f32.mrf.mxu0
    %v497 = vadd.f32 0.0, %v496
    %498 = vmatmul.bf16.gmra.mxu0 %v365
    %v499 = vpop.f32.mrf.mxu0
    %v500 = vadd.f32 0.0, %v499
    %v501 = vpop.f32.mrf.mxu0
    %v502 = vadd.f32 0.0, %v501
    %503 = vmatmul.bf16.gmra.mxu0 %v366
    %v504 = vpop.f32.mrf.mxu0
    %v505 = vadd.f32 0.0, %v504
    %v506 = vpop.f32.mrf.mxu0
    %v507 = vadd.f32 0.0, %v506
    %508 = vmatmul.bf16.gmra.mxu0 %v367
    %v509 = vpop.f32.mrf.mxu0
    %v510 = vadd.f32 0.0, %v509
    %v511 = vpop.f32.mrf.mxu0
    %v512 = vadd.f32 0.0, %v511
    %513 = vdwg.mxu0
    %v514 = vmul.f32 %v475, 0.9
    %v515 = vmul.f32 %v477, 0.9
    %v516 = vmul.f32 %v480, 0.9
    %v517 = vmul.f32 %v482, 0.9
    %v518 = vmul.f32 %v485, 0.9
    %v519 = vmul.f32 %v487, 0.9
    %v520 = vmul.f32 %v490, 0.9
    %v521 = vmul.f32 %v492, 0.9
    %v522 = vmul.f32 %v495, 0.9
    %v523 = vmul.f32 %v497, 0.9
    %v524 = vmul.f32 %v500, 0.9
    %v525 = vmul.f32 %v502, 0.9
    %v526 = vmul.f32 %v505, 0.9
    %v527 = vmul.f32 %v507, 0.9
    %v528 = vmul.f32 %v510, 0.9
    %v529 = vmul.f32 %v512, 0.9
    %v530 = vadd.f32 %v514, %v284
    %v531 = vadd.f32 %v515, %v285
    %v532 = vadd.f32 %v516, %v286
    %v533 = vadd.f32 %v517, %v287
    %v534 = vadd.f32 %v518, %v288
    %v535 = vadd.f32 %v519, %v289
    %v536 = vadd.f32 %v520, %v290
    %v537 = vadd.f32 %v521, %v291
    %v538 = vadd.f32 %v522, %v292
    %v539 = vadd.f32 %v523, %v293
    %v540 = vadd.f32 %v524, %v294
    %v541 = vadd.f32 %v525, %v295
    %v542 = vadd.f32 %v526, %v296
    %v543 = vadd.f32 %v527, %v297
    %v544 = vadd.f32 %v528, %v298
    %v545 = vadd.f32 %v529, %v299
    %v546 = vpack.c.bf16 %v531, %v530
    %v547 = vpack.c.bf16 %v533, %v532
    %v548 = vpack.c.bf16 %v535, %v534
    %v549 = vpack.c.bf16 %v537, %v536
    %v550 = vpack.c.bf16 %v539, %v538
    %v551 = vpack.c.bf16 %v541, %v540
    %v552 = vpack.c.bf16 %v543, %v542
    %v553 = vpack.c.bf16 %v545, %v544
    %554 = vmatpush.bf16.msra.mxu0 %v553
    %555 = vmatpush.bf16.msra.mxu0 %v552
    %556 = vmatpush.bf16.msra.mxu0 %v551
    %557 = vmatpush.bf16.msra.mxu0 %v550
    %558 = vmatpush.bf16.msra.mxu0 %v549
    %559 = vmatpush.bf16.msra.mxu0 %v548
    %560 = vmatpush.bf16.msra.mxu0 %v547
    %561 = vmatpush.bf16.msra.mxu0 %v546
    %562 = vmatmul.bf16.gmra.mxu0 %v360
    %v563 = vpop.f32.mrf.mxu0
    %v564 = vadd.f32 0.0, %v563
    %v565 = vpop.f32.mrf.mxu0
    %v566 = vadd.f32 0.0, %v565
    %567 = vmatmul.bf16.gmra.mxu0 %v361
    %v568 = vpop.f32.mrf.mxu0
    %v569 = vadd.f32 0.0, %v568
    %v570 = vpop.f32.mrf.mxu0
    %v571 = vadd.f32 0.0, %v570
    %572 = vmatmul.bf16.gmra.mxu0 %v362
    %v573 = vpop.f32.mrf.mxu0
    %v574 = vadd.f32 0.0, %v573
    %v575 = vpop.f32.mrf.mxu0
    %v576 = vadd.f32 0.0, %v575
    %577 = vmatmul.bf16.gmra.mxu0 %v363
    %v578 = vpop.f32.mrf.mxu0
    %v579 = vadd.f32 0.0, %v578
    %v580 = vpop.f32.mrf.mxu0
    %v581 = vadd.f32 0.0, %v580
    %582 = vmatmul.bf16.gmra.mxu0 %v364
    %v583 = vpop.f32.mrf.mxu0
    %v584 = vadd.f32 0.0, %v583
    %v585 = vpop.f32.mrf.mxu0
    %v586 = vadd.f32 0.0, %v585
    %587 = vmatmul.bf16.gmra.mxu0 %v365
    %v588 = vpop.f32.mrf.mxu0
    %v589 = vadd.f32 0.0, %v588
    %v590 = vpop.f32.mrf.mxu0
    %v591 = vadd.f32 0.0, %v590
    %592 = vmatmul.bf16.gmra.mxu0 %v366
    %v593 = vpop.f32.mrf.mxu0
    %v594 = vadd.f32 0.0, %v593
    %v595 = vpop.f32.mrf.mxu0
    %v596 = vadd.f32 0.0, %v595
    %597 = vmatmul.bf16.gmra.mxu0 %v367
    %v598 = vpop.f32.mrf.mxu0
    %v599 = vadd.f32 0.0, %v598
    %v600 = vpop.f32.mrf.mxu0
    %v601 = vadd.f32 0.0, %v600
    %602 = vdwg.mxu0
    %v603 = vmul.f32 %v564, 0.9
    %v604 = vmul.f32 %v566, 0.9
    %v605 = vmul.f32 %v569, 0.9
    %v606 = vmul.f32 %v571, 0.9
    %v607 = vmul.f32 %v574, 0.9
    %v608 = vmul.f32 %v576, 0.9
    %v609 = vmul.f32 %v579, 0.9
    %v610 = vmul.f32 %v581, 0.9
    %v611 = vmul.f32 %v584, 0.9
    %v612 = vmul.f32 %v586, 0.9
    %v613 = vmul.f32 %v589, 0.9
    %v614 = vmul.f32 %v591, 0.9
    %v615 = vmul.f32 %v594, 0.9
    %v616 = vmul.f32 %v596, 0.9
    %v617 = vmul.f32 %v599, 0.9
    %v618 = vmul.f32 %v601, 0.9
    %v619 = vadd.f32 %v603, %v284
    %v620 = vadd.f32 %v604, %v285
    %v621 = vadd.f32 %v605, %v286
    %v622 = vadd.f32 %v606, %v287
    %v623 = vadd.f32 %v607, %v288
    %v624 = vadd.f32 %v608, %v289
    %v625 = vadd.f32 %v609, %v290
    %v626 = vadd.f32 %v610, %v291
    %v627 = vadd.f32 %v611, %v292
    %v628 = vadd.f32 %v612, %v293
    %v629 = vadd.f32 %v613, %v294
    %v630 = vadd.f32 %v614, %v295
    %v631 = vadd.f32 %v615, %v296
    %v632 = vadd.f32 %v616, %v297
    %v633 = vadd.f32 %v617, %v298
    %v634 = vadd.f32 %v618, %v299
    %v635 = vpack.c.bf16 %v620, %v619
    %v636 = vpack.c.bf16 %v622, %v621
    %v637 = vpack.c.bf16 %v624, %v623
    %v638 = vpack.c.bf16 %v626, %v625
    %v639 = vpack.c.bf16 %v628, %v627
    %v640 = vpack.c.bf16 %v630, %v629
    %v641 = vpack.c.bf16 %v632, %v631
    %v642 = vpack.c.bf16 %v634, %v633
    %643 = vmatpush.bf16.msra.mxu0 %v642
    %644 = vmatpush.bf16.msra.mxu0 %v641
    %645 = vmatpush.bf16.msra.mxu0 %v640
    %646 = vmatpush.bf16.msra.mxu0 %v639
    %647 = vmatpush.bf16.msra.mxu0 %v638
    %648 = vmatpush.bf16.msra.mxu0 %v637
    %649 = vmatpush.bf16.msra.mxu0 %v636
    %650 = vmatpush.bf16.msra.mxu0 %v635
    %651 = vmatmul.bf16.gmra.mxu0 %v360
    %v652 = vpop.f32.mrf.mxu0
    %v653 = vadd.f32 0.0, %v652
    %v654 = vpop.f32.mrf.mxu0
    %v655 = vadd.f32 0.0, %v654
    %656 = vmatmul.bf16.gmra.mxu0 %v361
    %v657 = vpop.f32.mrf.mxu0
    %v658 = vadd.f32 0.0, %v657
    %v659 = vpop.f32.mrf.mxu0
    %v660 = vadd.f32 0.0, %v659
    %661 = vmatmul.bf16.gmra.mxu0 %v362
    %v662 = vpop.f32.mrf.mxu0
    %v663 = vadd.f32 0.0, %v662
    %v664 = vpop.f32.mrf.mxu0
    %v665 = vadd.f32 0.0, %v664
    %666 = vmatmul.bf16.gmra.mxu0 %v363
    %v667 = vpop.f32.mrf.mxu0
    %v668 = vadd.f32 0.0, %v667
    %v669 = vpop.f32.mrf.mxu0
    %v670 = vadd.f32 0.0, %v669
    %671 = vmatmul.bf16.gmra.mxu0 %v364
    %v672 = vpop.f32.mrf.mxu0
    %v673 = vadd.f32 0.0, %v672
    %v674 = vpop.f32.mrf.mxu0
    %v675 = vadd.f32 0.0, %v674
    %676 = vmatmul.bf16.gmra.mxu0 %v365
    %v677 = vpop.f32.mrf.mxu0
    %v678 = vadd.f32 0.0, %v677
    %v679 = vpop.f32.mrf.mxu0
    %v680 = vadd.f32 0.0, %v679
    %681 = vmatmul.bf16.gmra.mxu0 %v366
    %v682 = vpop.f32.mrf.mxu0
    %v683 = vadd.f32 0.0, %v682
    %v684 = vpop.f32.mrf.mxu0
    %v685 = vadd.f32 0.0, %v684
    %686 = vmatmul.bf16.gmra.mxu0 %v367
    %v687 = vpop.f32.mrf.mxu0
    %v688 = vadd.f32 0.0, %v687
    %v689 = vpop.f32.mrf.mxu0
    %v690 = vadd.f32 0.0, %v689
    %691 = vdwg.mxu0
    %v692 = vmul.f32 %v653, 0.9
    %v693 = vmul.f32 %v655, 0.9
    %v694 = vmul.f32 %v658, 0.9
    %v695 = vmul.f32 %v660, 0.9
    %v696 = vmul.f32 %v663, 0.9
    %v697 = vmul.f32 %v665, 0.9
    %v698 = vmul.f32 %v668, 0.9
    %v699 = vmul.f32 %v670, 0.9
    %v700 = vmul.f32 %v673, 0.9
    %v701 = vmul.f32 %v675, 0.9
    %v702 = vmul.f32 %v678, 0.9
    %v703 = vmul.f32 %v680, 0.9
    %v704 = vmul.f32 %v683, 0.9
    %v705 = vmul.f32 %v685, 0.9
    %v706 = vmul.f32 %v688, 0.9
    %v707 = vmul.f32 %v690, 0.9
    %v708 = vadd.f32 %v692, %v284
    %v709 = vadd.f32 %v693, %v285
    %v710 = vadd.f32 %v694, %v286
    %v711 = vadd.f32 %v695, %v287
    %v712 = vadd.f32 %v696, %v288
    %v713 = vadd.f32 %v697, %v289
    %v714 = vadd.f32 %v698, %v290
    %v715 = vadd.f32 %v699, %v291
    %v716 = vadd.f32 %v700, %v292
    %v717 = vadd.f32 %v701, %v293
    %v718 = vadd.f32 %v702, %v294
    %v719 = vadd.f32 %v703, %v295
    %v720 = vadd.f32 %v704, %v296
    %v721 = vadd.f32 %v705, %v297
    %v722 = vadd.f32 %v706, %v298
    %v723 = vadd.f32 %v707, %v299
    %v724 = vpack.c.bf16 %v709, %v708
    %v725 = vpack.c.bf16 %v711, %v710
    %v726 = vpack.c.bf16 %v713, %v712
    %v727 = vpack.c.bf16 %v715, %v714
    %v728 = vpack.c.bf16 %v717, %v716
    %v729 = vpack.c.bf16 %v719, %v718
    %v730 = vpack.c.bf16 %v721, %v720
    %v731 = vpack.c.bf16 %v723, %v722
    %732 = vmatpush.bf16.msra.mxu0 %v731
    %733 = vmatpush.bf16.msra.mxu0 %v730
    %734 = vmatpush.bf16.msra.mxu0 %v729
    %735 = vmatpush.bf16.msra.mxu0 %v728
    %736 = vmatpush.bf16.msra.mxu0 %v727
    %737 = vmatpush.bf16.msra.mxu0 %v726
    %738 = vmatpush.bf16.msra.mxu0 %v725
    %739 = vmatpush.bf16.msra.mxu0 %v724
    %740 = vmatmul.bf16.gmra.mxu0 %v360
    %v741 = vpop.f32.mrf.mxu0
    %v742 = vadd.f32 0.0, %v741
    %v743 = vpop.f32.mrf.mxu0
    %v744 = vadd.f32 0.0, %v743
    %745 = vmatmul.bf16.gmra.mxu0 %v361
    %v746 = vpop.f32.mrf.mxu0
    %v747 = vadd.f32 0.0, %v746
    %v748 = vpop.f32.mrf.mxu0
    %v749 = vadd.f32 0.0, %v748
    %750 = vmatmul.bf16.gmra.mxu0 %v362
    %v751 = vpop.f32.mrf.mxu0
    %v752 = vadd.f32 0.0, %v751
    %v753 = vpop.f32.mrf.mxu0
    %v754 = vadd.f32 0.0, %v753
    %755 = vmatmul.bf16.gmra.mxu0 %v363
    %v756 = vpop.f32.mrf.mxu0
    %v757 = vadd.f32 0.0, %v756
    %v758 = vpop.f32.mrf.mxu0
    %v759 = vadd.f32 0.0, %v758
    %760 = vmatmul.bf16.gmra.mxu0 %v364
    %v761 = vpop.f32.mrf.mxu0
    %v762 = vadd.f32 0.0, %v761
    %v763 = vpop.f32.mrf.mxu0
    %v764 = vadd.f32 0.0, %v763
    %765 = vmatmul.bf16.gmra.mxu0 %v365
    %v766 = vpop.f32.mrf.mxu0
    %v767 = vadd.f32 0.0, %v766
    %v768 = vpop.f32.mrf.mxu0
    %v769 = vadd.f32 0.0, %v768
    %770 = vmatmul.bf16.gmra.mxu0 %v366
    %v771 = vpop.f32.mrf.mxu0
    %v772 = vadd.f32 0.0, %v771
    %v773 = vpop.f32.mrf.mxu0
    %v774 = vadd.f32 0.0, %v773
    %775 = vmatmul.bf16.gmra.mxu0 %v367
    %v776 = vpop.f32.mrf.mxu0
    %v777 = vadd.f32 0.0, %v776
    %v778 = vpop.f32.mrf.mxu0
    %v779 = vadd.f32 0.0, %v778
    %780 = vdwg.mxu0
    %v781 = vmul.f32 %v742, 0.9
    %v782 = vmul.f32 %v744, 0.9
    %v783 = vmul.f32 %v747, 0.9
    %v784 = vmul.f32 %v749, 0.9
    %v785 = vmul.f32 %v752, 0.9
    %v786 = vmul.f32 %v754, 0.9
    %v787 = vmul.f32 %v757, 0.9
    %v788 = vmul.f32 %v759, 0.9
    %v789 = vmul.f32 %v762, 0.9
    %v790 = vmul.f32 %v764, 0.9
    %v791 = vmul.f32 %v767, 0.9
    %v792 = vmul.f32 %v769, 0.9
    %v793 = vmul.f32 %v772, 0.9
    %v794 = vmul.f32 %v774, 0.9
    %v795 = vmul.f32 %v777, 0.9
    %v796 = vmul.f32 %v779, 0.9
    %v797 = vadd.f32 %v781, %v284
    %v798 = vadd.f32 %v782, %v285
    %v799 = vadd.f32 %v783, %v286
    %v800 = vadd.f32 %v784, %v287
    %v801 = vadd.f32 %v785, %v288
    %v802 = vadd.f32 %v786, %v289
    %v803 = vadd.f32 %v787, %v290
    %v804 = vadd.f32 %v788, %v291
    %v805 = vadd.f32 %v789, %v292
    %v806 = vadd.f32 %v790, %v293
    %v807 = vadd.f32 %v791, %v294
    %v808 = vadd.f32 %v792, %v295
    %v809 = vadd.f32 %v793, %v296
    %v810 = vadd.f32 %v794, %v297
    %v811 = vadd.f32 %v795, %v298
    %v812 = vadd.f32 %v796, %v299
    %v813 = vpack.c.bf16 %v798, %v797
    %v814 = vpack.c.bf16 %v800, %v799
    %v815 = vpack.c.bf16 %v802, %v801
    %v816 = vpack.c.bf16 %v804, %v803
    %v817 = vpack.c.bf16 %v806, %v805
    %v818 = vpack.c.bf16 %v808, %v807
    %v819 = vpack.c.bf16 %v810, %v809
    %v820 = vpack.c.bf16 %v812, %v811
    %821 = vmatpush.bf16.msra.mxu0 %v820
    %822 = vmatpush.bf16.msra.mxu0 %v819
    %823 = vmatpush.bf16.msra.mxu0 %v818
    %824 = vmatpush.bf16.msra.mxu0 %v817
    %825 = vmatpush.bf16.msra.mxu0 %v816
    %826 = vmatpush.bf16.msra.mxu0 %v815
    %827 = vmatpush.bf16.msra.mxu0 %v814
    %828 = vmatpush.bf16.msra.mxu0 %v813
    %829 = vmatmul.bf16.gmra.mxu0 %v360
    %v830 = vpop.f32.mrf.mxu0
    %v831 = vadd.f32 0.0, %v830
    %v832 = vpop.f32.mrf.mxu0
    %v833 = vadd.f32 0.0, %v832
    %834 = vmatmul.bf16.gmra.mxu0 %v361
    %v835 = vpop.f32.mrf.mxu0
    %v836 = vadd.f32 0.0, %v835
    %v837 = vpop.f32.mrf.mxu0
    %v838 = vadd.f32 0.0, %v837
    %839 = vmatmul.bf16.gmra.mxu0 %v362
    %v840 = vpop.f32.mrf.mxu0
    %v841 = vadd.f32 0.0, %v840
    %v842 = vpop.f32.mrf.mxu0
    %v843 = vadd.f32 0.0, %v842
    %844 = vmatmul.bf16.gmra.mxu0 %v363
    %v845 = vpop.f32.mrf.mxu0
    %v846 = vadd.f32 0.0, %v845
    %v847 = vpop.f32.mrf.mxu0
    %v848 = vadd.f32 0.0, %v847
    %849 = vmatmul.bf16.gmra.mxu0 %v364
    %v850 = vpop.f32.mrf.mxu0
    %v851 = vadd.f32 0.0, %v850
    %v852 = vpop.f32.mrf.mxu0
    %v853 = vadd.f32 0.0, %v852
    %854 = vmatmul.bf16.gmra.mxu0 %v365
    %v855 = vpop.f32.mrf.mxu0
    %v856 = vadd.f32 0.0, %v855
    %v857 = vpop.f32.mrf.mxu0
    %v858 = vadd.f32 0.0, %v857
    %859 = vmatmul.bf16.gmra.mxu0 %v366
    %v860 = vpop.f32.mrf.mxu0
    %v861 = vadd.f32 0.0, %v860
    %v862 = vpop.f32.mrf.mxu0
    %v863 = vadd.f32 0.0, %v862
    %864 = vmatmul.bf16.gmra.mxu0 %v367
    %v865 = vpop.f32.mrf.mxu0
    %v866 = vadd.f32 0.0, %v865
    %v867 = vpop.f32.mrf.mxu0
    %v868 = vadd.f32 0.0, %v867
    %869 = vdwg.mxu0
    %v870 = vmul.f32 %v831, 0.9
    %v871 = vmul.f32 %v833, 0.9
    %v872 = vmul.f32 %v836, 0.9
    %v873 = vmul.f32 %v838, 0.9
    %v874 = vmul.f32 %v841, 0.9
    %v875 = vmul.f32 %v843, 0.9
    %v876 = vmul.f32 %v846, 0.9
    %v877 = vmul.f32 %v848, 0.9
    %v878 = vmul.f32 %v851, 0.9
    %v879 = vmul.f32 %v853, 0.9
    %v880 = vmul.f32 %v856, 0.9
    %v881 = vmul.f32 %v858, 0.9
    %v882 = vmul.f32 %v861, 0.9
    %v883 = vmul.f32 %v863, 0.9
    %v884 = vmul.f32 %v866, 0.9
    %v885 = vmul.f32 %v868, 0.9
    %v886 = vadd.f32 %v870, %v284
    %v887 = vadd.f32 %v871, %v285
    %v888 = vadd.f32 %v872, %v286
    %v889 = vadd.f32 %v873, %v287
    %v890 = vadd.f32 %v874, %v288
    %v891 = vadd.f32 %v875, %v289
    %v892 = vadd.f32 %v876, %v290
    %v893 = vadd.f32 %v877, %v291
    %v894 = vadd.f32 %v878, %v292
    %v895 = vadd.f32 %v879, %v293
    %v896 = vadd.f32 %v880, %v294
    %v897 = vadd.f32 %v881, %v295
    %v898 = vadd.f32 %v882, %v296
    %v899 = vadd.f32 %v883, %v297
    %v900 = vadd.f32 %v884, %v298
    %v901 = vadd.f32 %v885, %v299
    %v902 = vpack.c.bf16 %v887, %v886
    %v903 = vpack.c.bf16 %v889, %v888
    %v904 = vpack.c.bf16 %v891, %v890
    %v905 = vpack.c.bf16 %v893, %v892
    %v906 = vpack.c.bf16 %v895, %v894
    %v907 = vpack.c.bf16 %v897, %v896
    %v908 = vpack.c.bf16 %v899, %v898
    %v909 = vpack.c.bf16 %v901, %v900
    %910 = vmatpush.bf16.msra.mxu0 %v909
    %911 = vmatpush.bf16.msra.mxu0 %v908
    %912 = vmatpush.bf16.msra.mxu0 %v907
    %913 = vmatpush.bf16.msra.mxu0 %v906
    %914 = vmatpush.bf16.msra.mxu0 %v905
    %915 = vmatpush.bf16.msra.mxu0 %v904
    %916 = vmatpush.bf16.msra.mxu0 %v903
    %917 = vmatpush.bf16.msra.mxu0 %v902
    %918 = vmatmul.bf16.gmra.mxu0 %v360
    %v919 = vpop.f32.mrf.mxu0
    %v920 = vadd.f32 0.0, %v919
    %v921 = vpop.f32.mrf.mxu0
    %v922 = vadd.f32 0.0, %v921
    %923 = vmatmul.bf16.gmra.mxu0 %v361
    %v924 = vpop.f32.mrf.mxu0
    %v925 = vadd.f32 0.0, %v924
    %v926 = vpop.f32.mrf.mxu0
    %v927 = vadd.f32 0.0, %v926
    %928 = vmatmul.bf16.gmra.mxu0 %v362
    %v929 = vpop.f32.mrf.mxu0
    %v930 = vadd.f32 0.0, %v929
    %v931 = vpop.f32.mrf.mxu0
    %v932 = vadd.f32 0.0, %v931
    %933 = vmatmul.bf16.gmra.mxu0 %v363
    %v934 = vpop.f32.mrf.mxu0
    %v935 = vadd.f32 0.0, %v934
    %v936 = vpop.f32.mrf.mxu0
    %v937 = vadd.f32 0.0, %v936
    %938 = vmatmul.bf16.gmra.mxu0 %v364
    %v939 = vpop.f32.mrf.mxu0
    %v940 = vadd.f32 0.0, %v939
    %v941 = vpop.f32.mrf.mxu0
    %v942 = vadd.f32 0.0, %v941
    %943 = vmatmul.bf16.gmra.mxu0 %v365
    %v944 = vpop.f32.mrf.mxu0
    %v945 = vadd.f32 0.0, %v944
    %v946 = vpop.f32.mrf.mxu0
    %v947 = vadd.f32 0.0, %v946
    %948 = vmatmul.bf16.gmra.mxu0 %v366
    %v949 = vpop.f32.mrf.mxu0
    %v950 = vadd.f32 0.0, %v949
    %v951 = vpop.f32.mrf.mxu0
    %v952 = vadd.f32 0.0, %v951
    %953 = vmatmul.bf16.gmra.mxu0 %v367
    %v954 = vpop.f32.mrf.mxu0
    %v955 = vadd.f32 0.0, %v954
    %v956 = vpop.f32.mrf.mxu0
    %v957 = vadd.f32 0.0, %v956
    %958 = vdwg.mxu0
    %v959 = vmul.f32 %v920, 0.9
    %v960 = vmul.f32 %v922, 0.9
    %v961 = vmul.f32 %v925, 0.9
    %v962 = vmul.f32 %v927, 0.9
    %v963 = vmul.f32 %v930, 0.9
    %v964 = vmul.f32 %v932, 0.9
    %v965 = vmul.f32 %v935, 0.9
    %v966 = vmul.f32 %v937, 0.9
    %v967 = vmul.f32 %v940, 0.9
    %v968 = vmul.f32 %v942, 0.9
    %v969 = vmul.f32 %v945, 0.9
    %v970 = vmul.f32 %v947, 0.9
    %v971 = vmul.f32 %v950, 0.9
    %v972 = vmul.f32 %v952, 0.9
    %v973 = vmul.f32 %v955, 0.9
    %v974 = vmul.f32 %v957, 0.9
    %v975 = vadd.f32 %v959, %v284
    %v976 = vadd.f32 %v960, %v285
    %v977 = vadd.f32 %v961, %v286
    %v978 = vadd.f32 %v962, %v287
    %v979 = vadd.f32 %v963, %v288
    %v980 = vadd.f32 %v964, %v289
    %v981 = vadd.f32 %v965, %v290
    %v982 = vadd.f32 %v966, %v291
    %v983 = vadd.f32 %v967, %v292
    %v984 = vadd.f32 %v968, %v293
    %v985 = vadd.f32 %v969, %v294
    %v986 = vadd.f32 %v970, %v295
    %v987 = vadd.f32 %v971, %v296
    %v988 = vadd.f32 %v972, %v297
    %v989 = vadd.f32 %v973, %v298
    %v990 = vadd.f32 %v974, %v299
    %v991 = vpack.c.bf16 %v976, %v975
    %v992 = vpack.c.bf16 %v978, %v977
    %v993 = vpack.c.bf16 %v980, %v979
    %v994 = vpack.c.bf16 %v982, %v981
    %v995 = vpack.c.bf16 %v984, %v983
    %v996 = vpack.c.bf16 %v986, %v985
    %v997 = vpack.c.bf16 %v988, %v987
    %v998 = vpack.c.bf16 %v990, %v989
    %999 = vmatpush.bf16.msra.mxu0 %v998
    %1000 = vmatpush.bf16.msra.mxu0 %v997
    %1001 = vmatpush.bf16.msra.mxu0 %v996
    %1002 = vmatpush.bf16.msra.mxu0 %v995
    %1003 = vmatpush.bf16.msra.mxu0 %v994
    %1004 = vmatpush.bf16.msra.mxu0 %v993
    %1005 = vmatpush.bf16.msra.mxu0 %v992
    %1006 = vmatpush.bf16.msra.mxu0 %v991
    %1007 = vmatmul.bf16.gmra.mxu0 %v360
    %v1008 = vpop.f32.mrf.mxu0
    %v1009 = vadd.f32 0.0, %v1008
    %v1010 = vpop.f32.mrf.mxu0
    %v1011 = vadd.f32 0.0, %v1010
    %1012 = vmatmul.bf16.gmra.mxu0 %v361
    %v1013 = vpop.f32.mrf.mxu0
    %v1014 = vadd.f32 0.0, %v1013
    %v1015 = vpop.f32.mrf.mxu0
    %v1016 = vadd.f32 0.0, %v1015
    %1017 = vmatmul.bf16.gmra.mxu0 %v362
    %v1018 = vpop.f32.mrf.mxu0
    %v1019 = vadd.f32 0.0, %v1018
    %v1020 = vpop.f32.mrf.mxu0
    %v1021 = vadd.f32 0.0, %v1020
    %1022 = vmatmul.bf16.gmra.mxu0 %v363
    %v1023 = vpop.f32.mrf.mxu0
    %v1024 = vadd.f32 0.0, %v1023
    %v1025 = vpop.f32.mrf.mxu0
    %v1026 = vadd.f32 0.0, %v1025
    %1027 = vmatmul.bf16.gmra.mxu0 %v364
    %v1028 = vpop.f32.mrf.mxu0
    %v1029 = vadd.f32 0.0, %v1028
    %v1030 = vpop.f32.mrf.mxu0
    %v1031 = vadd.f32 0.0, %v1030
    %1032 = vmatmul.bf16.gmra.mxu0 %v365
    %v1033 = vpop.f32.mrf.mxu0
    %v1034 = vadd.f32 0.0, %v1033
    %v1035 = vpop.f32.mrf.mxu0
    %v1036 = vadd.f32 0.0, %v1035
    %1037 = vmatmul.bf16.gmra.mxu0 %v366
    %v1038 = vpop.f32.mrf.mxu0
    %v1039 = vadd.f32 0.0, %v1038
    %v1040 = vpop.f32.mrf.mxu0
    %v1041 = vadd.f32 0.0, %v1040
    %1042 = vmatmul.bf16.gmra.mxu0 %v367
    %v1043 = vpop.f32.mrf.mxu0
    %v1044 = vadd.f32 0.0, %v1043
    %v1045 = vpop.f32.mrf.mxu0
    %v1046 = vadd.f32 0.0, %v1045
    %1047 = vdwg.mxu0
    %v1048 = vmul.f32 %v1009, 0.9
    %v1049 = vmul.f32 %v1011, 0.9
    %v1050 = vmul.f32 %v1014, 0.9
    %v1051 = vmul.f32 %v1016, 0.9
    %v1052 = vmul.f32 %v1019, 0.9
    %v1053 = vmul.f32 %v1021, 0.9
    %v1054 = vmul.f32 %v1024, 0.9
    %v1055 = vmul.f32 %v1026, 0.9
    %v1056 = vmul.f32 %v1029, 0.9
    %v1057 = vmul.f32 %v1031, 0.9
    %v1058 = vmul.f32 %v1034, 0.9
    %v1059 = vmul.f32 %v1036, 0.9
    %v1060 = vmul.f32 %v1039, 0.9
    %v1061 = vmul.f32 %v1041, 0.9
    %v1062 = vmul.f32 %v1044, 0.9
    %v1063 = vmul.f32 %v1046, 0.9
    %v1064 = vadd.f32 %v1048, %v284
    %v1065 = vadd.f32 %v1049, %v285
    %v1066 = vadd.f32 %v1050, %v286
    %v1067 = vadd.f32 %v1051, %v287
    %v1068 = vadd.f32 %v1052, %v288
    %v1069 = vadd.f32 %v1053, %v289
    %v1070 = vadd.f32 %v1054, %v290
    %v1071 = vadd.f32 %v1055, %v291
    %v1072 = vadd.f32 %v1056, %v292
    %v1073 = vadd.f32 %v1057, %v293
    %v1074 = vadd.f32 %v1058, %v294
    %v1075 = vadd.f32 %v1059, %v295
    %v1076 = vadd.f32 %v1060, %v296
    %v1077 = vadd.f32 %v1061, %v297
    %v1078 = vadd.f32 %v1062, %v298
    %v1079 = vadd.f32 %v1063, %v299
    %v1080 = vpack.c.bf16 %v1065, %v1064
    %v1081 = vpack.c.bf16 %v1067, %v1066
    %v1082 = vpack.c.bf16 %v1069, %v1068
    %v1083 = vpack.c.bf16 %v1071, %v1070
    %v1084 = vpack.c.bf16 %v1073, %v1072
    %v1085 = vpack.c.bf16 %v1075, %v1074
    %v1086 = vpack.c.bf16 %v1077, %v1076
    %v1087 = vpack.c.bf16 %v1079, %v1078
    %1088 = vmatpush.bf16.msra.mxu0 %v1087
    %1089 = vmatpush.bf16.msra.mxu0 %v1086
    %1090 = vmatpush.bf16.msra.mxu0 %v1085
    %1091 = vmatpush.bf16.msra.mxu0 %v1084
    %1092 = vmatpush.bf16.msra.mxu0 %v1083
    %1093 = vmatpush.bf16.msra.mxu0 %v1082
    %1094 = vmatpush.bf16.msra.mxu0 %v1081
    %1095 = vmatpush.bf16.msra.mxu0 %v1080
    %1096 = vmatmul.bf16.gmra.mxu0 %v360
    %v1097 = vpop.f32.mrf.mxu0
    %v1098 = vadd.f32 0.0, %v1097
    %v1099 = vpop.f32.mrf.mxu0
    %v1100 = vadd.f32 0.0, %v1099
    %1101 = vmatmul.bf16.gmra.mxu0 %v361
    %v1102 = vpop.f32.mrf.mxu0
    %v1103 = vadd.f32 0.0, %v1102
    %v1104 = vpop.f32.mrf.mxu0
    %v1105 = vadd.f32 0.0, %v1104
    %1106 = vmatmul.bf16.gmra.mxu0 %v362
    %v1107 = vpop.f32.mrf.mxu0
    %v1108 = vadd.f32 0.0, %v1107
    %v1109 = vpop.f32.mrf.mxu0
    %v1110 = vadd.f32 0.0, %v1109
    %1111 = vmatmul.bf16.gmra.mxu0 %v363
    %v1112 = vpop.f32.mrf.mxu0
    %v1113 = vadd.f32 0.0, %v1112
    %v1114 = vpop.f32.mrf.mxu0
    %v1115 = vadd.f32 0.0, %v1114
    %1116 = vmatmul.bf16.gmra.mxu0 %v364
    %v1117 = vpop.f32.mrf.mxu0
    %v1118 = vadd.f32 0.0, %v1117
    %v1119 = vpop.f32.mrf.mxu0
    %v1120 = vadd.f32 0.0, %v1119
    %1121 = vmatmul.bf16.gmra.mxu0 %v365
    %v1122 = vpop.f32.mrf.mxu0
    %v1123 = vadd.f32 0.0, %v1122
    %v1124 = vpop.f32.mrf.mxu0
    %v1125 = vadd.f32 0.0, %v1124
    %1126 = vmatmul.bf16.gmra.mxu0 %v366
    %v1127 = vpop.f32.mrf.mxu0
    %v1128 = vadd.f32 0.0, %v1127
    %v1129 = vpop.f32.mrf.mxu0
    %v1130 = vadd.f32 0.0, %v1129
    %1131 = vmatmul.bf16.gmra.mxu0 %v367
    %v1132 = vpop.f32.mrf.mxu0
    %v1133 = vadd.f32 0.0, %v1132
    %v1134 = vpop.f32.mrf.mxu0
    %v1135 = vadd.f32 0.0, %v1134
    %1136 = vdwg.mxu0
    %v1137 = vmul.f32 %v1098, 0.9
    %v1138 = vmul.f32 %v1100, 0.9
    %v1139 = vmul.f32 %v1103, 0.9
    %v1140 = vmul.f32 %v1105, 0.9
    %v1141 = vmul.f32 %v1108, 0.9
    %v1142 = vmul.f32 %v1110, 0.9
    %v1143 = vmul.f32 %v1113, 0.9
    %v1144 = vmul.f32 %v1115, 0.9
    %v1145 = vmul.f32 %v1118, 0.9
    %v1146 = vmul.f32 %v1120, 0.9
    %v1147 = vmul.f32 %v1123, 0.9
    %v1148 = vmul.f32 %v1125, 0.9
    %v1149 = vmul.f32 %v1128, 0.9
    %v1150 = vmul.f32 %v1130, 0.9
    %v1151 = vmul.f32 %v1133, 0.9
    %v1152 = vmul.f32 %v1135, 0.9
    %v1153 = vadd.f32 %v1137, %v284
    %v1154 = vadd.f32 %v1138, %v285
    %v1155 = vadd.f32 %v1139, %v286
    %v1156 = vadd.f32 %v1140, %v287
    %v1157 = vadd.f32 %v1141, %v288
    %v1158 = vadd.f32 %v1142, %v289
    %v1159 = vadd.f32 %v1143, %v290
    %v1160 = vadd.f32 %v1144, %v291
    %v1161 = vadd.f32 %v1145, %v292
    %v1162 = vadd.f32 %v1146, %v293
    %v1163 = vadd.f32 %v1147, %v294
    %v1164 = vadd.f32 %v1148, %v295
    %v1165 = vadd.f32 %v1149, %v296
    %v1166 = vadd.f32 %v1150, %v297
    %v1167 = vadd.f32 %v1151, %v298
    %v1168 = vadd.f32 %v1152, %v299
    %v1169 = vpack.c.bf16 %v1154, %v1153
    %v1170 = vpack.c.bf16 %v1156, %v1155
    %v1171 = vpack.c.bf16 %v1158, %v1157
    %v1172 = vpack.c.bf16 %v1160, %v1159
    %v1173 = vpack.c.bf16 %v1162, %v1161
    %v1174 = vpack.c.bf16 %v1164, %v1163
    %v1175 = vpack.c.bf16 %v1166, %v1165
    %v1176 = vpack.c.bf16 %v1168, %v1167
    %1177 = vmatpush.bf16.msra.mxu0 %v1176
    %1178 = vmatpush.bf16.msra.mxu0 %v1175
    %1179 = vmatpush.bf16.msra.mxu0 %v1174
    %1180 = vmatpush.bf16.msra.mxu0 %v1173
    %1181 = vmatpush.bf16.msra.mxu0 %v1172
    %1182 = vmatpush.bf16.msra.mxu0 %v1171
    %1183 = vmatpush.bf16.msra.mxu0 %v1170
    %1184 = vmatpush.bf16.msra.mxu0 %v1169
    %1185 = vmatmul.bf16.gmra.mxu0 %v360
    %v1186 = vpop.f32.mrf.mxu0
    %v1187 = vadd.f32 0.0, %v1186
    %v1188 = vpop.f32.mrf.mxu0
    %v1189 = vadd.f32 0.0, %v1188
    %1190 = vmatmul.bf16.gmra.mxu0 %v361
    %v1191 = vpop.f32.mrf.mxu0
    %v1192 = vadd.f32 0.0, %v1191
    %v1193 = vpop.f32.mrf.mxu0
    %v1194 = vadd.f32 0.0, %v1193
    %1195 = vmatmul.bf16.gmra.mxu0 %v362
    %v1196 = vpop.f32.mrf.mxu0
    %v1197 = vadd.f32 0.0, %v1196
    %v1198 = vpop.f32.mrf.mxu0
    %v1199 = vadd.f32 0.0, %v1198
    %1200 = vmatmul.bf16.gmra.mxu0 %v363
    %v1201 = vpop.f32.mrf.mxu0
    %v1202 = vadd.f32 0.0, %v1201
    %v1203 = vpop.f32.mrf.mxu0
    %v1204 = vadd.f32 0.0, %v1203
    %1205 = vmatmul.bf16.gmra.mxu0 %v364
    %v1206 = vpop.f32.mrf.mxu0
    %v1207 = vadd.f32 0.0, %v1206
    %v1208 = vpop.f32.mrf.mxu0
    %v1209 = vadd.f32 0.0, %v1208
    %1210 = vmatmul.bf16.gmra.mxu0 %v365
    %v1211 = vpop.f32.mrf.mxu0
    %v1212 = vadd.f32 0.0, %v1211
    %v1213 = vpop.f32.mrf.mxu0
    %v1214 = vadd.f32 0.0, %v1213
    %1215 = vmatmul.bf16.gmra.mxu0 %v366
    %v1216 = vpop.f32.mrf.mxu0
    %v1217 = vadd.f32 0.0, %v1216
    %v1218 = vpop.f32.mrf.mxu0
    %v1219 = vadd.f32 0.0, %v1218
    %1220 = vmatmul.bf16.gmra.mxu0 %v367
    %v1221 = vpop.f32.mrf.mxu0
    %v1222 = vadd.f32 0.0, %v1221
    %v1223 = vpop.f32.mrf.mxu0
    %v1224 = vadd.f32 0.0, %v1223
    %1225 = vdwg.mxu0
    %v1226 = vmul.f32 %v1187, 0.9
    %v1227 = vmul.f32 %v1189, 0.9
    %v1228 = vmul.f32 %v1192, 0.9
    %v1229 = vmul.f32 %v1194, 0.9
    %v1230 = vmul.f32 %v1197, 0.9
    %v1231 = vmul.f32 %v1199, 0.9
    %v1232 = vmul.f32 %v1202, 0.9
    %v1233 = vmul.f32 %v1204, 0.9
    %v1234 = vmul.f32 %v1207, 0.9
    %v1235 = vmul.f32 %v1209, 0.9
    %v1236 = vmul.f32 %v1212, 0.9
    %v1237 = vmul.f32 %v1214, 0.9
    %v1238 = vmul.f32 %v1217, 0.9
    %v1239 = vmul.f32 %v1219, 0.9
    %v1240 = vmul.f32 %v1222, 0.9
    %v1241 = vmul.f32 %v1224, 0.9
    %v1242 = vadd.f32 %v1226, %v284
    %v1243 = vadd.f32 %v1227, %v285
    %v1244 = vadd.f32 %v1228, %v286
    %v1245 = vadd.f32 %v1229, %v287
    %v1246 = vadd.f32 %v1230, %v288
    %v1247 = vadd.f32 %v1231, %v289
    %v1248 = vadd.f32 %v1232, %v290
    %v1249 = vadd.f32 %v1233, %v291
    %v1250 = vadd.f32 %v1234, %v292
    %v1251 = vadd.f32 %v1235, %v293
    %v1252 = vadd.f32 %v1236, %v294
    %v1253 = vadd.f32 %v1237, %v295
    %v1254 = vadd.f32 %v1238, %v296
    %v1255 = vadd.f32 %v1239, %v297
    %v1256 = vadd.f32 %v1240, %v298
    %v1257 = vadd.f32 %v1241, %v299
    %1258 = vst [vmem:[#allocation10] sm:$0xff] %v1242
    %1259 = vst [vmem:[#allocation10 + $0x8] sm:$0xff] %v1243
    %1260 = vst [vmem:[#allocation10 + $0x10] sm:$0xff] %v1244
    %1261 = vst [vmem:[#allocation10 + $0x18] sm:$0xff] %v1245
    %1262 = vst [vmem:[#allocation10 + $0x20] sm:$0xff] %v1246
    %1263 = vst [vmem:[#allocation10 + $0x28] sm:$0xff] %v1247
    %1264 = vst [vmem:[#allocation10 + $0x30] sm:$0xff] %v1248
    %1265 = vst [vmem:[#allocation10 + $0x38] sm:$0xff] %v1249
    %1266 = vst [vmem:[#allocation10 + $0x40] sm:$0xff] %v1250
    %1267 = vst [vmem:[#allocation10 + $0x48] sm:$0xff] %v1251
    %1268 = vst [vmem:[#allocation10 + $0x50] sm:$0xff] %v1252
    %1269 = vst [vmem:[#allocation10 + $0x58] sm:$0xff] %v1253
    %1270 = vst [vmem:[#allocation10 + $0x60] sm:$0xff] %v1254
    %1271 = vst [vmem:[#allocation10 + $0x68] sm:$0xff] %v1255
    %1272 = vst [vmem:[#allocation10 + $0x70] sm:$0xff] %v1256
    %1273 = vst [vmem:[#allocation10 + $0x78] sm:$0xff] %v1257
    // Predicated region
    $region38: #{tpu_custom_call.1} parent=1 // pred_check
      _
    $region39: #{tpu_custom_call.1} parent=1 // pred_check_branch
      %1275 = sbr.rel (0) target = $region41
    $region40: #{tpu_custom_call.1} parent=1 // pred_region
      %1277 = vsyncadd [#allocation6], 0
      %s1278 = sshll.u32 [#allocation10], 4
      %s1279 = int_to_ptr.vmem [resolvable:$true] %s1278
      %s1280 = sshll.u32 %s6, 4
      %s1281 = int_to_ptr.hbm [resolvable:$true] %s1280
      %1286 = dma.vmem_to_hbm [thread:$0]  %s1279, 2048, %s1281, [#allocation6], 128, 128, 8
    $region41: #{tpu_custom_call.1} parent=1 // pred_fallthru
      _
    // Predicated region
    $region42: #{tpu_custom_call.1} parent=1 // pred_check
      _
    $region43: #{tpu_custom_call.1} parent=1 // pred_check_branch
      %1288 = sbr.rel (0) target = $region45
    $region44: #{tpu_custom_call.1} parent=1 // pred_region
      %1290 = dma.done [#allocation6], 2048
    $region45: #{tpu_custom_call.1} parent=1 // pred_fallthru
      _
    %1291 = vsyncpa [#allocation5], 1
    %1292 = vsyncpa [#allocation8], 1
    %1293 = vsyncpa [#allocation6], 1
  %1294 = vsyncmov [#allocation3]
  %s1295 = vpop.sfrf %1294
  %p1296 = scmp.eq.s32.totalorder %s1295, 0
  %p1297 = pneg %p1296
  %1299 = shalt.err (%p1297)

</llo_original>
